<compile_context>
chip_gen: v7x
topology: tpu7x:2x2x1
jax: 0.10.0
libtpu: 0.0.40
codegen_flags: <defaults>
</compile_context>

<pallas_src>
import jax
import jax.numpy as jnp
from jax.experimental import pallas as pl
from jax.experimental.pallas import tpu as pltpu

BN_EPS = 1e-5
MXU_DTYPE = jnp.bfloat16   # set to jnp.float32 to recover 1e-4 accuracy
PAD = 16                   # data rows start at an aligned (16-row-tile) offset


# ------------------------------- fused kernel -------------------------------
def _make_fused_kernel(NB, H, W, Cin, Cout):
    WCi = W * Cin
    WCo = W * Cout

    def kernel(x_ref, wa_ref, w2_ref, sa_ref, s2_ref, o_ref, xp_ref, hp_ref):
        # x_ref : (NB, H, W*Cin)        unpadded input rows (lane-dense, bf16)
        # wa_ref: (3, W*Cin, 2*W*Cout)  banded weights [conv_skip | ConvBlock1]
        # w2_ref: (3, W*Cout, W*Cout)   banded weights for ConvBlock2
        # sa_ref: (1, 2*W*Cout) f32     folded BN+bias shifts [skip | block1]
        # s2_ref: (1, W*Cout)   f32     folded BN+bias shift for block2
        # o_ref : (NB, H, W*Cout) f32   output rows
        # xp_ref: (PAD+H+1, W*Cin)      VMEM staging, H-padded input (reused per image)
        # hp_ref: (PAD+H+1, W*Cout)     VMEM staging, H-padded ConvBlock1 activation

        # Zero only the two halo rows of each staging buffer.  Done every step
        # (cheap: 4 single-row stores) so megacore-sharded grids never read
        # stale/uninitialized halos; the data rows are overwritten per image.
        zci = jnp.zeros((1, WCi), xp_ref.dtype)
        zco = jnp.zeros((1, WCo), hp_ref.dtype)
        xp_ref[PAD - 1:PAD, :] = zci
        xp_ref[PAD + H:PAD + H + 1, :] = zci
        hp_ref[PAD - 1:PAD, :] = zco
        hp_ref[PAD + H:PAD + H + 1, :] = zco

        # Hoisted bias broadcasts; used directly as accumulator init.
        sa_b = jnp.broadcast_to(sa_ref[...], (H, 2 * WCo))
        s2_b = jnp.broadcast_to(s2_ref[...], (H, WCo))

        for b in range(NB):   # unrolled: amortizes per-step overhead over NB images
            # ---- stage image b with zero H-halo rows (aligned store at row PAD) ----
            xp_ref[PAD:PAD + H, :] = x_ref[b]

            # ---- conv_skip + ConvBlock1 share the input: one matmul per ky tap ----
            acc_a = sa_b
            for dy in range(3):
                acc_a = acc_a + jnp.dot(
                    xp_ref[PAD - 1 + dy:PAD - 1 + dy + H, :], wa_ref[dy],
                    preferred_element_type=jnp.float32)

            x_in = acc_a[:, :WCo]                       # conv_skip: conv + BN (no ReLU)
            h = jnp.maximum(acc_a[:, WCo:], 0.0)        # ConvBlock1: conv + BN + ReLU

            # ---- ConvBlock2 reads h from VMEM staging (zero halos give the H pad) ----
            hp_ref[PAD:PAD + H, :] = h.astype(hp_ref.dtype)

            acc2 = s2_b
            for dy in range(3):
                acc2 = acc2 + jnp.dot(
                    hp_ref[PAD - 1 + dy:PAD - 1 + dy + H, :], w2_ref[dy],
                    preferred_element_type=jnp.float32)

            # ConvBlock2 (conv + BN + ReLU) then residual add of the skip path.
            o_ref[b] = (jnp.maximum(acc2, 0.0) + x_in).astype(o_ref.dtype)

    return kernel


# --------------------------- host-side param prep ---------------------------
def _fold_bn_banded(w_oihw, b, gamma, beta, mean, var, *, W):
    """Fold conv bias + eval-mode BN, then expand the 3x3 conv into three
    (ky-indexed) block-banded matrices acting on flattened (W*Cin)-wide rows."""
    Cout, Cin, _, _ = w_oihw.shape
    scale = gamma / jnp.sqrt(var + BN_EPS)                     # (Cout,)
    shift = beta + (b - mean) * scale                          # (Cout,)
    # (O,I,ky,kx) -> (ky,kx,I,O); fold BN scale straight into the weights.
    w_f = jnp.transpose(w_oihw, (2, 3, 1, 0)) * scale          # (3,3,Cin,Cout)

    wi = jnp.arange(W)[:, None]
    wo = jnp.arange(W)[None, :]
    big = jnp.zeros((3, W, Cin, W, Cout), jnp.float32)
    for dx in range(3):
        band = (wi - wo + 1 == dx).astype(jnp.float32)         # (W, W)
        big = big + band[None, :, None, :, None] * w_f[:, dx][:, None, :, None, :]
    big = big.reshape(3, W * Cin, W * Cout)                    # [ky, w_in*Cin+ci, w_out*Cout+co]
    shift_row = jnp.tile(shift, W).reshape(1, W * Cout)        # [0, w*Cout+co] = shift[co]
    return big, shift_row


def prepare_params(params, *, W, mxu_dtype=MXU_DTYPE):
    """One-time (per set of weights) folding; hoisted out of the forward path."""
    wa_s, sa_s = _fold_bn_banded(*params["skip"], W=W)
    wa_1, sa_1 = _fold_bn_banded(*params["block1"], W=W)
    wa_2, sa_2 = _fold_bn_banded(*params["block2"], W=W)
    return {
        "wa": jnp.concatenate([wa_s, wa_1], axis=-1).astype(mxu_dtype),  # (3, W*Cin, 2*W*Cout)
        "w2": wa_2.astype(mxu_dtype),                                    # (3, W*Cout, W*Cout)
        "sa": jnp.concatenate([sa_s, sa_1], axis=-1),                    # (1, 2*W*Cout) f32
        "s2": sa_2,                                                      # (1, W*Cout)   f32
    }


def _choose_nb(N, H):
    # Largest divisor of N whose stacked row count still fits the MXU depth
    # budget (~256 rows on v6e/v7x) -> fills M and amortizes per-step overhead.
    best = 1
    for nb in range(1, N + 1):
        if N % nb == 0 and nb * H <= 256:
            best = nb
    return best


# --------------------------------- wrapper -----------------------------------
@jax.jit
def res_conv_block_2d(x_nchw, prepared):
    """Forward pass of ResConvBlock2d. x_nchw: (N, Cin, H, W) -> (N, Cout, H, W)."""
    N, Cin, H, W = x_nchw.shape
    WCi = W * Cin
    WCo = prepared["s2"].shape[-1]
    Cout = WCo // W
    mxu_dtype = prepared["wa"].dtype
    NB = _choose_nb(N, H)

    # NCHW -> NHWC -> flattened rows (channels minor).  No host-side H pad:
    # padding is done inside the kernel via the VMEM staging buffers.
    xr = jnp.transpose(x_nchw, (0, 2, 3, 1)).reshape(N, H, WCi).astype(mxu_dtype)

    kernel = _make_fused_kernel(NB, H, W, Cin, Cout)
    itemsize = jnp.dtype(mxu_dtype).itemsize
    flops = 2 * N * H * 3 * (WCi * 2 * WCo + WCo * WCo)
    bytes_accessed = (N * H * WCi * itemsize
                      + 3 * WCi * 2 * WCo * itemsize
                      + 3 * WCo * WCo * itemsize
                      + (2 * WCo + WCo) * 4
                      + N * H * WCo * 4)

    out_flat = pl.pallas_call(
        kernel,
        out_shape=jax.ShapeDtypeStruct((N, H, WCo), jnp.float32),
        grid_spec=pltpu.PrefetchScalarGridSpec(
            num_scalar_prefetch=0,
            grid=(N // NB,),
            in_specs=[
                pl.BlockSpec((NB, H, WCi), lambda n: (n, 0, 0)),
                pl.BlockSpec((3, WCi, 2 * WCo), lambda n: (0, 0, 0)),
                pl.BlockSpec((3, WCo, WCo), lambda n: (0, 0, 0)),
                pl.BlockSpec((1, 2 * WCo), lambda n: (0, 0)),
                pl.BlockSpec((1, WCo), lambda n: (0, 0)),
            ],
            out_specs=pl.BlockSpec((NB, H, WCo), lambda n: (n, 0, 0)),
            scratch_shapes=[
                pltpu.VMEM((PAD + H + 1, WCi), mxu_dtype),
                pltpu.VMEM((PAD + H + 1, WCo), mxu_dtype),
            ],
        ),
        compiler_params=pltpu.CompilerParams(
            dimension_semantics=("parallel",)),
        cost_estimate=pl.CostEstimate(
            flops=flops, transcendentals=0, bytes_accessed=bytes_accessed),
    )(xr, prepared["wa"], prepared["w2"], prepared["sa"], prepared["s2"])

    out = out_flat.reshape(N, H, W, Cout)
    return jnp.transpose(out, (0, 3, 1, 2))                    # NHWC -> NCHW


# ----------------------------- reference (pure JAX) -----------------------------
def _ref_conv_bn_relu(x, w, b, gamma, beta, mean, var, relu):
    y = jax.lax.conv_general_dilated(
        x, w, window_strides=(1, 1), padding=((1, 1), (1, 1)),
        dimension_numbers=("NCHW", "OIHW", "NCHW"))
    y = y + b[None, :, None, None]
    y = (y - mean[None, :, None, None]) / jnp.sqrt(var[None, :, None, None] + BN_EPS)
    y = y * gamma[None, :, None, None] + beta[None, :, None, None]
    if relu:
        y = jnp.maximum(y, 0.0)
    return y


def _ref_forward(x, params):
    x_in = _ref_conv_bn_relu(x, *params["skip"], relu=False)
    h = _ref_conv_bn_relu(x, *params["block1"], relu=True)
    out = _ref_conv_bn_relu(h, *params["block2"], relu=True) + x_in
    return out


# ----------------------------- deterministic init -----------------------------
def _init_conv_bn(key, cin, cout):
    k1, k2, k3, k4, k5, k6 = jax.random.split(key, 6)
    fan_in = cin * 9
    bound = 1.0 / jnp.sqrt(fan_in)
    w = jax.random.uniform(k1, (cout, cin, 3, 3), jnp.float32, -bound, bound)
    b = jax.random.uniform(k2, (cout,), jnp.float32, -bound, bound)
    gamma = 1.0 + 0.1 * jax.random.normal(k3, (cout,), jnp.float32)
    beta = 0.1 * jax.random.normal(k4, (cout,), jnp.float32)
    mean = 0.1 * jax.random.normal(k5, (cout,), jnp.float32)
    var = 1.0 + 0.1 * jax.random.uniform(k6, (cout,), jnp.float32)
    return (w, b, gamma, beta, mean, var)


if __name__ == "__main__":
    key = jax.random.PRNGKey(0)
    kx, k1, k2, k3 = jax.random.split(key, 4)

    N, in_ch, out_ch, H, W = 2, 4, 8, 16, 16
    x = jax.random.normal(kx, (N, in_ch, H, W), jnp.float32)

    params = {
        "block1": _init_conv_bn(k1, in_ch, out_ch),
        "block2": _init_conv_bn(k2, out_ch, out_ch),
        "skip":   _init_conv_bn(k3, in_ch, out_ch),
    }

    # BN folding + banded-weight build done once, outside the forward hot path.
    prepared = jax.block_until_ready(prepare_params(params, W=W))

    out = jax.block_until_ready(res_conv_block_2d(x, prepared))
    ref = jax.block_until_ready(_ref_forward(x, params))

    assert out.shape == (N, out_ch, H, W), out.shape
    # bf16 MXU inputs with f32 accumulation: relax tolerance (f32 mode meets 1e-4).
    tol = 1e-4 if MXU_DTYPE == jnp.float32 else 5e-2
    err = float(jnp.max(jnp.abs(out - ref)))
    assert jnp.allclose(out, ref, atol=tol, rtol=tol), err
    print("KERNEL_OK")
</pallas_src>

<mosaic_0001>
module attributes {stable_mosaic.version = 11 : i64} {
  func.func @kernel(%arg0: i32, %arg1: memref<2x16x64xbf16, #tpu.memory_space<vmem>>, %arg2: memref<3x64x256xbf16, #tpu.memory_space<vmem>>, %arg3: memref<3x128x128xbf16, #tpu.memory_space<vmem>>, %arg4: memref<1x256xf32, #tpu.memory_space<vmem>>, %arg5: memref<1x128xf32, #tpu.memory_space<vmem>>, %arg6: memref<2x16x128xf32, #tpu.memory_space<vmem>>, %arg7: memref<33x64xbf16, #tpu.memory_space<vmem>>, %arg8: memref<33x128xbf16, #tpu.memory_space<vmem>>) attributes {dimension_semantics = [#tpu.dimension_semantics<parallel>], iteration_bounds = array<i64: 1>, scalar_prefetch = 0 : i64, scratch_operands = 2 : i64, tpu.core_type = #tpu.core_type<tc>, window_params = [{transform_indices = @transform_0, window_bounds = array<i64: 2, 16, 64>}, {pipeline_mode = #tpu.pipeline_mode<synchronous>, transform_indices = @transform_1, window_bounds = array<i64: 3, 64, 256>}, {pipeline_mode = #tpu.pipeline_mode<synchronous>, transform_indices = @transform_2, window_bounds = array<i64: 3, 128, 128>}, {pipeline_mode = #tpu.pipeline_mode<synchronous>, transform_indices = @transform_3, window_bounds = array<i64: 1, 256>}, {pipeline_mode = #tpu.pipeline_mode<synchronous>, transform_indices = @transform_4, window_bounds = array<i64: 1, 128>}, {transform_indices = @transform_5, window_bounds = array<i64: 2, 16, 128>}]} {
    %cst = arith.constant 0.000000e+00 : bf16
    %0 = vector.broadcast %cst : bf16 to vector<1x64xbf16>
    %cst_0 = arith.constant 0.000000e+00 : bf16
    %1 = vector.broadcast %cst_0 : bf16 to vector<1x128xbf16>
    %c15 = arith.constant 15 : index
    %c0 = arith.constant 0 : index
    %2 = vector.load %arg7[%c15, %c0] : memref<33x64xbf16, #tpu.memory_space<vmem>>, vector<1x64xbf16>
    tpu.vector_store %arg7[%c15, %c0], %0 {strides = array<i32>} : memref<33x64xbf16, #tpu.memory_space<vmem>>, vector<1x64xbf16>,
    %c32 = arith.constant 32 : index
    %c0_1 = arith.constant 0 : index
    %3 = vector.load %arg7[%c32, %c0_1] : memref<33x64xbf16, #tpu.memory_space<vmem>>, vector<1x64xbf16>
    tpu.vector_store %arg7[%c32, %c0_1], %0 {strides = array<i32>} : memref<33x64xbf16, #tpu.memory_space<vmem>>, vector<1x64xbf16>,
    %c15_2 = arith.constant 15 : index
    %c0_3 = arith.constant 0 : index
    %4 = vector.load %arg8[%c15_2, %c0_3] : memref<33x128xbf16, #tpu.memory_space<vmem>>, vector<1x128xbf16>
    tpu.vector_store %arg8[%c15_2, %c0_3], %1 {strides = array<i32>} : memref<33x128xbf16, #tpu.memory_space<vmem>>, vector<1x128xbf16>,
    %c32_4 = arith.constant 32 : index
    %c0_5 = arith.constant 0 : index
    %5 = vector.load %arg8[%c32_4, %c0_5] : memref<33x128xbf16, #tpu.memory_space<vmem>>, vector<1x128xbf16>
    tpu.vector_store %arg8[%c32_4, %c0_5], %1 {strides = array<i32>} : memref<33x128xbf16, #tpu.memory_space<vmem>>, vector<1x128xbf16>,
    %c0_6 = arith.constant 0 : index
    %c0_7 = arith.constant 0 : index
    %6 = vector.load %arg4[%c0_6, %c0_7] : memref<1x256xf32, #tpu.memory_space<vmem>>, vector<1x256xf32>
    %7 = vector.shape_cast %6 : vector<1x256xf32> to vector<1x256xf32>
    %8 = vector.broadcast %7 : vector<1x256xf32> to vector<16x256xf32>
    %c0_8 = arith.constant 0 : index
    %c0_9 = arith.constant 0 : index
    %9 = vector.load %arg5[%c0_8, %c0_9] : memref<1x128xf32, #tpu.memory_space<vmem>>, vector<1x128xf32>
    %10 = vector.shape_cast %9 : vector<1x128xf32> to vector<1x128xf32>
    %11 = vector.broadcast %10 : vector<1x128xf32> to vector<16x128xf32>
    %c0_10 = arith.constant 0 : index
    %c0_11 = arith.constant 0 : index
    %c0_12 = arith.constant 0 : index
    %12 = vector.load %arg1[%c0_10, %c0_11, %c0_12] : memref<2x16x64xbf16, #tpu.memory_space<vmem>>, vector<1x16x64xbf16>
    %13 = vector.shape_cast %12 : vector<1x16x64xbf16> to vector<16x64xbf16>
    %c16 = arith.constant 16 : index
    %c0_13 = arith.constant 0 : index
    %14 = vector.load %arg7[%c16, %c0_13] : memref<33x64xbf16, #tpu.memory_space<vmem>>, vector<16x64xbf16>
    tpu.vector_store %arg7[%c16, %c0_13], %13 {strides = array<i32>} : memref<33x64xbf16, #tpu.memory_space<vmem>>, vector<16x64xbf16>,
    %c15_14 = arith.constant 15 : index
    %c0_15 = arith.constant 0 : index
    %15 = vector.load %arg7[%c15_14, %c0_15] : memref<33x64xbf16, #tpu.memory_space<vmem>>, vector<16x64xbf16>
    %c0_16 = arith.constant 0 : index
    %c0_17 = arith.constant 0 : index
    %c0_18 = arith.constant 0 : index
    %16 = vector.load %arg2[%c0_16, %c0_17, %c0_18] : memref<3x64x256xbf16, #tpu.memory_space<vmem>>, vector<1x64x256xbf16>
    %17 = vector.shape_cast %16 : vector<1x64x256xbf16> to vector<64x256xbf16>
    %cst_19 = arith.constant dense<0.000000e+00> : vector<16x256xf32>
    %18 = tpu.matmul %15, %17, %cst_19 {dimension_numbers = #tpu.dot_dimension_numbers<[1], [0], [0], [1], [0, 0, 1, 1], [], []>} : vector<16x64xbf16>, vector<64x256xbf16>, vector<16x256xf32> -> vector<16x256xf32>
    %19 = arith.addf %8, %18 : vector<16x256xf32>
    %c16_20 = arith.constant 16 : index
    %c0_21 = arith.constant 0 : index
    %20 = vector.load %arg7[%c16_20, %c0_21] : memref<33x64xbf16, #tpu.memory_space<vmem>>, vector<16x64xbf16>
    %c1 = arith.constant 1 : index
    %c0_22 = arith.constant 0 : index
    %c0_23 = arith.constant 0 : index
    %21 = vector.load %arg2[%c1, %c0_22, %c0_23] : memref<3x64x256xbf16, #tpu.memory_space<vmem>>, vector<1x64x256xbf16>
    %22 = vector.shape_cast %21 : vector<1x64x256xbf16> to vector<64x256xbf16>
    %cst_24 = arith.constant dense<0.000000e+00> : vector<16x256xf32>
    %23 = tpu.matmul %20, %22, %cst_24 {dimension_numbers = #tpu.dot_dimension_numbers<[1], [0], [0], [1], [0, 0, 1, 1], [], []>} : vector<16x64xbf16>, vector<64x256xbf16>, vector<16x256xf32> -> vector<16x256xf32>
    %24 = arith.addf %19, %23 : vector<16x256xf32>
    %c17 = arith.constant 17 : index
    %c0_25 = arith.constant 0 : index
    %25 = vector.load %arg7[%c17, %c0_25] : memref<33x64xbf16, #tpu.memory_space<vmem>>, vector<16x64xbf16>
    %c2 = arith.constant 2 : index
    %c0_26 = arith.constant 0 : index
    %c0_27 = arith.constant 0 : index
    %26 = vector.load %arg2[%c2, %c0_26, %c0_27] : memref<3x64x256xbf16, #tpu.memory_space<vmem>>, vector<1x64x256xbf16>
    %27 = vector.shape_cast %26 : vector<1x64x256xbf16> to vector<64x256xbf16>
    %cst_28 = arith.constant dense<0.000000e+00> : vector<16x256xf32>
    %28 = tpu.matmul %25, %27, %cst_28 {dimension_numbers = #tpu.dot_dimension_numbers<[1], [0], [0], [1], [0, 0, 1, 1], [], []>} : vector<16x64xbf16>, vector<64x256xbf16>, vector<16x256xf32> -> vector<16x256xf32>
    %29 = arith.addf %24, %28 : vector<16x256xf32>
    %30 = vector.extract_strided_slice %29 {offsets = [0, 0], sizes = [16, 128], strides = [1, 1]} : vector<16x256xf32> to vector<16x128xf32>
    %31 = vector.extract_strided_slice %29 {offsets = [0, 128], sizes = [16, 128], strides = [1, 1]} : vector<16x256xf32> to vector<16x128xf32>
    %cst_29 = arith.constant 0.000000e+00 : f32
    %32 = vector.broadcast %cst_29 : f32 to vector<16x128xf32>
    %33 = arith.maximumf %31, %32 : vector<16x128xf32>
    %34 = arith.truncf %33 : vector<16x128xf32> to vector<16x128xbf16>
    %c16_30 = arith.constant 16 : index
    %c0_31 = arith.constant 0 : index
    %35 = vector.load %arg8[%c16_30, %c0_31] : memref<33x128xbf16, #tpu.memory_space<vmem>>, vector<16x128xbf16>
    tpu.vector_store %arg8[%c16_30, %c0_31], %34 {strides = array<i32>} : memref<33x128xbf16, #tpu.memory_space<vmem>>, vector<16x128xbf16>,
    %c15_32 = arith.constant 15 : index
    %c0_33 = arith.constant 0 : index
    %36 = vector.load %arg8[%c15_32, %c0_33] : memref<33x128xbf16, #tpu.memory_space<vmem>>, vector<16x128xbf16>
    %c0_34 = arith.constant 0 : index
    %c0_35 = arith.constant 0 : index
    %c0_36 = arith.constant 0 : index
    %37 = vector.load %arg3[%c0_34, %c0_35, %c0_36] : memref<3x128x128xbf16, #tpu.memory_space<vmem>>, vector<1x128x128xbf16>
    %38 = vector.shape_cast %37 : vector<1x128x128xbf16> to vector<128x128xbf16>
    %cst_37 = arith.constant dense<0.000000e+00> : vector<16x128xf32>
    %39 = tpu.matmul %36, %38, %cst_37 {dimension_numbers = #tpu.dot_dimension_numbers<[1], [0], [0], [1], [0, 0, 1, 1], [], []>} : vector<16x128xbf16>, vector<128x128xbf16>, vector<16x128xf32> -> vector<16x128xf32>
    %40 = arith.addf %11, %39 : vector<16x128xf32>
    %c16_38 = arith.constant 16 : index
    %c0_39 = arith.constant 0 : index
    %41 = vector.load %arg8[%c16_38, %c0_39] : memref<33x128xbf16, #tpu.memory_space<vmem>>, vector<16x128xbf16>
    %c1_40 = arith.constant 1 : index
    %c0_41 = arith.constant 0 : index
    %c0_42 = arith.constant 0 : index
    %42 = vector.load %arg3[%c1_40, %c0_41, %c0_42] : memref<3x128x128xbf16, #tpu.memory_space<vmem>>, vector<1x128x128xbf16>
    %43 = vector.shape_cast %42 : vector<1x128x128xbf16> to vector<128x128xbf16>
    %cst_43 = arith.constant dense<0.000000e+00> : vector<16x128xf32>
    %44 = tpu.matmul %41, %43, %cst_43 {dimension_numbers = #tpu.dot_dimension_numbers<[1], [0], [0], [1], [0, 0, 1, 1], [], []>} : vector<16x128xbf16>, vector<128x128xbf16>, vector<16x128xf32> -> vector<16x128xf32>
    %45 = arith.addf %40, %44 : vector<16x128xf32>
    %c17_44 = arith.constant 17 : index
    %c0_45 = arith.constant 0 : index
    %46 = vector.load %arg8[%c17_44, %c0_45] : memref<33x128xbf16, #tpu.memory_space<vmem>>, vector<16x128xbf16>
    %c2_46 = arith.constant 2 : index
    %c0_47 = arith.constant 0 : index
    %c0_48 = arith.constant 0 : index
    %47 = vector.load %arg3[%c2_46, %c0_47, %c0_48] : memref<3x128x128xbf16, #tpu.memory_space<vmem>>, vector<1x128x128xbf16>
    %48 = vector.shape_cast %47 : vector<1x128x128xbf16> to vector<128x128xbf16>
    %cst_49 = arith.constant dense<0.000000e+00> : vector<16x128xf32>
    %49 = tpu.matmul %46, %48, %cst_49 {dimension_numbers = #tpu.dot_dimension_numbers<[1], [0], [0], [1], [0, 0, 1, 1], [], []>} : vector<16x128xbf16>, vector<128x128xbf16>, vector<16x128xf32> -> vector<16x128xf32>
    %50 = arith.addf %45, %49 : vector<16x128xf32>
    %cst_50 = arith.constant 0.000000e+00 : f32
    %51 = vector.broadcast %cst_50 : f32 to vector<16x128xf32>
    %52 = arith.maximumf %50, %51 : vector<16x128xf32>
    %53 = arith.addf %52, %30 : vector<16x128xf32>
    %c0_51 = arith.constant 0 : index
    %c0_52 = arith.constant 0 : index
    %c0_53 = arith.constant 0 : index
    %54 = vector.load %arg6[%c0_51, %c0_52, %c0_53] : memref<2x16x128xf32, #tpu.memory_space<vmem>>, vector<1x16x128xf32>
    %55 = vector.shape_cast %54 : vector<1x16x128xf32> to vector<16x128xf32>
    %56 = vector.shape_cast %53 : vector<16x128xf32> to vector<1x16x128xf32>
    tpu.vector_store %arg6[%c0_51, %c0_52, %c0_53], %56 {strides = array<i32>} : memref<2x16x128xf32, #tpu.memory_space<vmem>>, vector<1x16x128xf32>,
    %c1_54 = arith.constant 1 : index
    %c0_55 = arith.constant 0 : index
    %c0_56 = arith.constant 0 : index
    %57 = vector.load %arg1[%c1_54, %c0_55, %c0_56] : memref<2x16x64xbf16, #tpu.memory_space<vmem>>, vector<1x16x64xbf16>
    %58 = vector.shape_cast %57 : vector<1x16x64xbf16> to vector<16x64xbf16>
    %c16_57 = arith.constant 16 : index
    %c0_58 = arith.constant 0 : index
    %59 = vector.load %arg7[%c16_57, %c0_58] : memref<33x64xbf16, #tpu.memory_space<vmem>>, vector<16x64xbf16>
    tpu.vector_store %arg7[%c16_57, %c0_58], %58 {strides = array<i32>} : memref<33x64xbf16, #tpu.memory_space<vmem>>, vector<16x64xbf16>,
    %c15_59 = arith.constant 15 : index
    %c0_60 = arith.constant 0 : index
    %60 = vector.load %arg7[%c15_59, %c0_60] : memref<33x64xbf16, #tpu.memory_space<vmem>>, vector<16x64xbf16>
    %c0_61 = arith.constant 0 : index
    %c0_62 = arith.constant 0 : index
    %c0_63 = arith.constant 0 : index
    %61 = vector.load %arg2[%c0_61, %c0_62, %c0_63] : memref<3x64x256xbf16, #tpu.memory_space<vmem>>, vector<1x64x256xbf16>
    %62 = vector.shape_cast %61 : vector<1x64x256xbf16> to vector<64x256xbf16>
    %cst_64 = arith.constant dense<0.000000e+00> : vector<16x256xf32>
    %63 = tpu.matmul %60, %62, %cst_64 {dimension_numbers = #tpu.dot_dimension_numbers<[1], [0], [0], [1], [0, 0, 1, 1], [], []>} : vector<16x64xbf16>, vector<64x256xbf16>, vector<16x256xf32> -> vector<16x256xf32>
    %64 = arith.addf %8, %63 : vector<16x256xf32>
    %c16_65 = arith.constant 16 : index
    %c0_66 = arith.constant 0 : index
    %65 = vector.load %arg7[%c16_65, %c0_66] : memref<33x64xbf16, #tpu.memory_space<vmem>>, vector<16x64xbf16>
    %c1_67 = arith.constant 1 : index
    %c0_68 = arith.constant 0 : index
    %c0_69 = arith.constant 0 : index
    %66 = vector.load %arg2[%c1_67, %c0_68, %c0_69] : memref<3x64x256xbf16, #tpu.memory_space<vmem>>, vector<1x64x256xbf16>
    %67 = vector.shape_cast %66 : vector<1x64x256xbf16> to vector<64x256xbf16>
    %cst_70 = arith.constant dense<0.000000e+00> : vector<16x256xf32>
    %68 = tpu.matmul %65, %67, %cst_70 {dimension_numbers = #tpu.dot_dimension_numbers<[1], [0], [0], [1], [0, 0, 1, 1], [], []>} : vector<16x64xbf16>, vector<64x256xbf16>, vector<16x256xf32> -> vector<16x256xf32>
    %69 = arith.addf %64, %68 : vector<16x256xf32>
    %c17_71 = arith.constant 17 : index
    %c0_72 = arith.constant 0 : index
    %70 = vector.load %arg7[%c17_71, %c0_72] : memref<33x64xbf16, #tpu.memory_space<vmem>>, vector<16x64xbf16>
    %c2_73 = arith.constant 2 : index
    %c0_74 = arith.constant 0 : index
    %c0_75 = arith.constant 0 : index
    %71 = vector.load %arg2[%c2_73, %c0_74, %c0_75] : memref<3x64x256xbf16, #tpu.memory_space<vmem>>, vector<1x64x256xbf16>
    %72 = vector.shape_cast %71 : vector<1x64x256xbf16> to vector<64x256xbf16>
    %cst_76 = arith.constant dense<0.000000e+00> : vector<16x256xf32>
    %73 = tpu.matmul %70, %72, %cst_76 {dimension_numbers = #tpu.dot_dimension_numbers<[1], [0], [0], [1], [0, 0, 1, 1], [], []>} : vector<16x64xbf16>, vector<64x256xbf16>, vector<16x256xf32> -> vector<16x256xf32>
    %74 = arith.addf %69, %73 : vector<16x256xf32>
    %75 = vector.extract_strided_slice %74 {offsets = [0, 0], sizes = [16, 128], strides = [1, 1]} : vector<16x256xf32> to vector<16x128xf32>
    %76 = vector.extract_strided_slice %74 {offsets = [0, 128], sizes = [16, 128], strides = [1, 1]} : vector<16x256xf32> to vector<16x128xf32>
    %cst_77 = arith.constant 0.000000e+00 : f32
    %77 = vector.broadcast %cst_77 : f32 to vector<16x128xf32>
    %78 = arith.maximumf %76, %77 : vector<16x128xf32>
    %79 = arith.truncf %78 : vector<16x128xf32> to vector<16x128xbf16>
    %c16_78 = arith.constant 16 : index
    %c0_79 = arith.constant 0 : index
    %80 = vector.load %arg8[%c16_78, %c0_79] : memref<33x128xbf16, #tpu.memory_space<vmem>>, vector<16x128xbf16>
    tpu.vector_store %arg8[%c16_78, %c0_79], %79 {strides = array<i32>} : memref<33x128xbf16, #tpu.memory_space<vmem>>, vector<16x128xbf16>,
    %c15_80 = arith.constant 15 : index
    %c0_81 = arith.constant 0 : index
    %81 = vector.load %arg8[%c15_80, %c0_81] : memref<33x128xbf16, #tpu.memory_space<vmem>>, vector<16x128xbf16>
    %c0_82 = arith.constant 0 : index
    %c0_83 = arith.constant 0 : index
    %c0_84 = arith.constant 0 : index
    %82 = vector.load %arg3[%c0_82, %c0_83, %c0_84] : memref<3x128x128xbf16, #tpu.memory_space<vmem>>, vector<1x128x128xbf16>
    %83 = vector.shape_cast %82 : vector<1x128x128xbf16> to vector<128x128xbf16>
    %cst_85 = arith.constant dense<0.000000e+00> : vector<16x128xf32>
    %84 = tpu.matmul %81, %83, %cst_85 {dimension_numbers = #tpu.dot_dimension_numbers<[1], [0], [0], [1], [0, 0, 1, 1], [], []>} : vector<16x128xbf16>, vector<128x128xbf16>, vector<16x128xf32> -> vector<16x128xf32>
    %85 = arith.addf %11, %84 : vector<16x128xf32>
    %c16_86 = arith.constant 16 : index
    %c0_87 = arith.constant 0 : index
    %86 = vector.load %arg8[%c16_86, %c0_87] : memref<33x128xbf16, #tpu.memory_space<vmem>>, vector<16x128xbf16>
    %c1_88 = arith.constant 1 : index
    %c0_89 = arith.constant 0 : index
    %c0_90 = arith.constant 0 : index
    %87 = vector.load %arg3[%c1_88, %c0_89, %c0_90] : memref<3x128x128xbf16, #tpu.memory_space<vmem>>, vector<1x128x128xbf16>
    %88 = vector.shape_cast %87 : vector<1x128x128xbf16> to vector<128x128xbf16>
    %cst_91 = arith.constant dense<0.000000e+00> : vector<16x128xf32>
    %89 = tpu.matmul %86, %88, %cst_91 {dimension_numbers = #tpu.dot_dimension_numbers<[1], [0], [0], [1], [0, 0, 1, 1], [], []>} : vector<16x128xbf16>, vector<128x128xbf16>, vector<16x128xf32> -> vector<16x128xf32>
    %90 = arith.addf %85, %89 : vector<16x128xf32>
    %c17_92 = arith.constant 17 : index
    %c0_93 = arith.constant 0 : index
    %91 = vector.load %arg8[%c17_92, %c0_93] : memref<33x128xbf16, #tpu.memory_space<vmem>>, vector<16x128xbf16>
    %c2_94 = arith.constant 2 : index
    %c0_95 = arith.constant 0 : index
    %c0_96 = arith.constant 0 : index
    %92 = vector.load %arg3[%c2_94, %c0_95, %c0_96] : memref<3x128x128xbf16, #tpu.memory_space<vmem>>, vector<1x128x128xbf16>
    %93 = vector.shape_cast %92 : vector<1x128x128xbf16> to vector<128x128xbf16>
    %cst_97 = arith.constant dense<0.000000e+00> : vector<16x128xf32>
    %94 = tpu.matmul %91, %93, %cst_97 {dimension_numbers = #tpu.dot_dimension_numbers<[1], [0], [0], [1], [0, 0, 1, 1], [], []>} : vector<16x128xbf16>, vector<128x128xbf16>, vector<16x128xf32> -> vector<16x128xf32>
    %95 = arith.addf %90, %94 : vector<16x128xf32>
    %cst_98 = arith.constant 0.000000e+00 : f32
    %96 = vector.broadcast %cst_98 : f32 to vector<16x128xf32>
    %97 = arith.maximumf %95, %96 : vector<16x128xf32>
    %98 = arith.addf %97, %75 : vector<16x128xf32>
    %c1_99 = arith.constant 1 : index
    %c0_100 = arith.constant 0 : index
    %c0_101 = arith.constant 0 : index
    %99 = vector.load %arg6[%c1_99, %c0_100, %c0_101] : memref<2x16x128xf32, #tpu.memory_space<vmem>>, vector<1x16x128xf32>
    %100 = vector.shape_cast %99 : vector<1x16x128xf32> to vector<16x128xf32>
    %101 = vector.shape_cast %98 : vector<16x128xf32> to vector<1x16x128xf32>
    tpu.vector_store %arg6[%c1_99, %c0_100, %c0_101], %101 {strides = array<i32>} : memref<2x16x128xf32, #tpu.memory_space<vmem>>, vector<1x16x128xf32>,
    return
  }
  func.func @transform_0(%arg0: i32) -> (i32, i32, i32) {
    %c0_i32 = arith.constant 0 : i32
    %c0_i32_0 = arith.constant 0 : i32
    %c0_i32_1 = arith.constant 0 : i32
    return %arg0, %c0_i32, %c0_i32_0 : i32, i32, i32
  }
  func.func @transform_1(%arg0: i32) -> (i32, i32, i32) {
    %c0_i32 = arith.constant 0 : i32
    %c0_i32_0 = arith.constant 0 : i32
    %c0_i32_1 = arith.constant 0 : i32
    %c0_i32_2 = arith.constant 0 : i32
    return %c0_i32, %c0_i32_0, %c0_i32_1 : i32, i32, i32
  }
  func.func @transform_2(%arg0: i32) -> (i32, i32, i32) {
    %c0_i32 = arith.constant 0 : i32
    %c0_i32_0 = arith.constant 0 : i32
    %c0_i32_1 = arith.constant 0 : i32
    %c0_i32_2 = arith.constant 0 : i32
    return %c0_i32, %c0_i32_0, %c0_i32_1 : i32, i32, i32
  }
  func.func @transform_3(%arg0: i32) -> (i32, i32) {
    %c0_i32 = arith.constant 0 : i32
    %c0_i32_0 = arith.constant 0 : i32
    %c0_i32_1 = arith.constant 0 : i32
    return %c0_i32, %c0_i32_0 : i32, i32
  }
  func.func @transform_4(%arg0: i32) -> (i32, i32) {
    %c0_i32 = arith.constant 0 : i32
    %c0_i32_0 = arith.constant 0 : i32
    %c0_i32_1 = arith.constant 0 : i32
    return %c0_i32, %c0_i32_0 : i32, i32
  }
  func.func @transform_5(%arg0: i32) -> (i32, i32, i32) {
    %c0_i32 = arith.constant 0 : i32
    %c0_i32_0 = arith.constant 0 : i32
    %c0_i32_1 = arith.constant 0 : i32
    return %arg0, %c0_i32, %c0_i32_0 : i32, i32, i32
  }
}

</mosaic_0001>

<llo_original>
// kernel: res_conv_block_2d.1
$region0: #{res_conv_block_2d.1}
  #allocation0 [shape = 'u32[]', space=smem, size = 0x4, offset = 0x4, fixed_abs, tag = 'smem constant byte address 0x4 - core index']
  #allocation1 [shape = 'u32[144,128]{1,0:T(1,128)}', space=vmem, size = 0x12000, scoped, tag = 'internal scratch']
  #allocation2 [shape = 'bf16[33,64]{1,0:T(8,128)(2,1)}', space=vmem, size = 0x2800, scoped, tag = 'scratch operand']
  #allocation3 [shape = 'bf16[33,128]{1,0:T(8,128)(2,1)}', space=vmem, size = 0x2800, scoped, tag = 'scratch operand']
  %s0 = inlined_call_operand.vmem [shape: bf16[2,16,64], index: 0, kind: input, shape index: {}]
  %s1 = inlined_call_operand.vmem [shape: bf16[3,64,256], index: 1, kind: input, shape index: {}]
  %s2 = inlined_call_operand.vmem [shape: bf16[3,128,128], index: 2, kind: input, shape index: {}]
  %s3 = inlined_call_operand.vmem [shape: f32[1,256], index: 3, kind: input, shape index: {}]
  %s4 = inlined_call_operand.vmem [shape: f32[1,128], index: 4, kind: input, shape index: {}]
  %s5 = inlined_call_operand.vmem [shape: f32[2,16,128], index: 5, kind: output, shape index: {}]
  %s6 = sld [smem:[#allocation0]]
  $region30: #{res_conv_block_2d.1} parent=0
    _
  %s8 = ssub.s32 1, %s6
  %s9 = scalar_select 0, %s8, %s6
  // Predicated region
  $region2: #{res_conv_block_2d.1} parent=0 // pred_check
    _
  $region3: #{res_conv_block_2d.1} parent=0 // pred_check_branch
    %11 = sbr.rel (0) target = $region5
  $region4: #{res_conv_block_2d.1} parent=0 // pred_region
    _
  $region5: #{res_conv_block_2d.1} parent=0 // pred_fallthru
    _
  // Predicated region
  $region6: #{res_conv_block_2d.1} parent=0 // pred_check
    _
  $region7: #{res_conv_block_2d.1} parent=0 // pred_check_branch
    %13 = sbr.rel (0) target = $region9
  $region8: #{res_conv_block_2d.1} parent=0 // pred_region
    _
  $region9: #{res_conv_block_2d.1} parent=0 // pred_fallthru
    _
  // Predicated region
  $region10: #{res_conv_block_2d.1} parent=0 // pred_check
    _
  $region11: #{res_conv_block_2d.1} parent=0 // pred_check_branch
    %15 = sbr.rel (0) target = $region13
  $region12: #{res_conv_block_2d.1} parent=0 // pred_region
    _
  $region13: #{res_conv_block_2d.1} parent=0 // pred_fallthru
    _
  // Predicated region
  $region14: #{res_conv_block_2d.1} parent=0 // pred_check
    _
  $region15: #{res_conv_block_2d.1} parent=0 // pred_check_branch
    %17 = sbr.rel (0) target = $region17
  $region16: #{res_conv_block_2d.1} parent=0 // pred_region
    _
  $region17: #{res_conv_block_2d.1} parent=0 // pred_fallthru
    _
  // Predicated region
  $region18: #{res_conv_block_2d.1} parent=0 // pred_check
    _
  $region19: #{res_conv_block_2d.1} parent=0 // pred_check_branch
    %19 = sbr.rel (0) target = $region21
  $region20: #{res_conv_block_2d.1} parent=0 // pred_region
    _
  $region21: #{res_conv_block_2d.1} parent=0 // pred_fallthru
    _
  %vm21 = vcmask 519171
  %vm22 = vsmask.f32 7950
  %vm23 = vmand %vm21, %vm22
  %v24 = vld [vmem:[#allocation2 + $0x4] sm:$0x8]
  %v25 = vsel %vm23, 0, %v24
  %26 = vst [vmem:[#allocation2 + $0x4] sm:$0x8] %v25
  %vm27 = vcmask 516096
  %vm28 = vsmask.f32 256
  %vm29 = vmand %vm27, %vm28
  %v30 = vld [vmem:[#allocation2 + $0x10] sm:$0x1]
  %v31 = vsel %vm29, 0, %v30
  %32 = vst [vmem:[#allocation2 + $0x10] sm:$0x1] %v31
  %vm33 = vcmask 1043459
  %vm34 = vmand %vm33, %vm22
  %v35 = vld [vmem:[#allocation3 + $0x4] sm:$0x8]
  %v36 = vsel %vm34, 0, %v35
  %37 = vst [vmem:[#allocation3 + $0x4] sm:$0x8] %v36
  %vm38 = vcmask 1040384
  %vm39 = vmand %vm38, %vm28
  %v40 = vld [vmem:[#allocation3 + $0x10] sm:$0x1]
  %v41 = vsel %vm39, 0, %v40
  %42 = vst [vmem:[#allocation3 + $0x10] sm:$0x1] %v41
  %v43 = vld [vmem:[%s3] sm:$0x3]
  %v45 = vlaneseq
  %v46 = vshrl.u32 %v45, 7
  %v47 = vsub.s32 0, %v46
  %v48 = vrot.slane %v43, %v47
  %v49 = vlaneseq
  %v50 = vshrl.u32 %v49, 7
  %v51 = vsub.s32 1, %v50
  %v52 = vrot.slane %v43, %v51
  %v55 = vld [vmem:[%s4] sm:$0x1]
  %v57 = vlaneseq
  %v58 = vshrl.u32 %v57, 7
  %v59 = vsub.s32 0, %v58
  %v60 = vrot.slane %v55, %v59
  %v62 = vld [vmem:[%s0] sm:$0xf]
  %v63 = vld [vmem:[%s0 + $0x4] sm:$0xf]
  %vm64 = vcmask 519168
  %65 = vst.msk [vmem:[#allocation2 + $0x8] sm:$0xf] %vm64, %v62
  %66 = vst.msk [vmem:[#allocation2 + $0xc] sm:$0xf] %vm64, %v63
  %v67 = vld [vmem:[#allocation2 + $0x4] sm:$0x8]
  %v68 = vld [vmem:[#allocation2 + $0x8] sm:$0xf]
  %v69 = vld [vmem:[#allocation2 + $0xc] sm:$0xf]
  %v70 = vld [vmem:[%s1] sm:$0xff]
  %v71 = vld [vmem:[%s1 + $0x8] sm:$0xff]
  %v72 = vld [vmem:[%s1 + $0x10] sm:$0xff]
  %v73 = vld [vmem:[%s1 + $0x18] sm:$0xff]
  %v74 = vld [vmem:[%s1 + $0x20] sm:$0xff]
  %v75 = vld [vmem:[%s1 + $0x28] sm:$0xff]
  %v76 = vld [vmem:[%s1 + $0x30] sm:$0xff]
  %v77 = vld [vmem:[%s1 + $0x38] sm:$0xff]
  %v81 = vunpack.c.l.b16 %v67
  %v82 = vunpack.c.l.b16 %v68
  %v83 = vunpack.c.l.b16 %v69
  %v84 = vpack.c.b16 %v82, %v81
  %v85 = vpack.c.b16 %v83, %v83
  %vm86 = vsmask.f32 4352
  %v88 = vshrl.u32 %v84, 16
  %v90 = vrot.slane %v88, 3
  %v91 = vshll.u32 %v84, 16
  %v93 = vrot.slane %v91, 4
  %v94 = vor.u32 %v90, %v93
  %v96 = vshrl.u32 %v85, 16
  %v98 = vrot.slane %v96, 3
  %v99 = vshll.u32 %v85, 16
  %v101 = vrot.slane %v99, 4
  %v102 = vor.u32 %v98, %v101
  %v103 = vsel %vm86, %v94, %v102
  %v112 = vunpack.c.l.b16 %v70
  %v113 = vunpack.c.h.b16 %v70
  %v114 = vunpack.c.l.b16 %v71
  %v115 = vunpack.c.h.b16 %v71
  %v116 = vunpack.c.l.b16 %v72
  %v117 = vunpack.c.h.b16 %v72
  %v118 = vunpack.c.l.b16 %v73
  %v119 = vunpack.c.h.b16 %v73
  %v120 = vunpack.c.l.b16 %v74
  %v121 = vunpack.c.h.b16 %v74
  %v122 = vunpack.c.l.b16 %v75
  %v123 = vunpack.c.h.b16 %v75
  %v124 = vunpack.c.l.b16 %v76
  %v125 = vunpack.c.h.b16 %v76
  %v126 = vunpack.c.l.b16 %v77
  %v127 = vunpack.c.h.b16 %v77
  %v128 = vpack.c.b16 %v114, %v112
  %v129 = vpack.c.b16 %v115, %v113
  %v130 = vpack.c.b16 %v118, %v116
  %v131 = vpack.c.b16 %v119, %v117
  %v132 = vpack.c.b16 %v122, %v120
  %v133 = vpack.c.b16 %v123, %v121
  %v134 = vpack.c.b16 %v126, %v124
  %v135 = vpack.c.b16 %v127, %v125
  %vm144 = vcmask 523264
  %v146 = vsel %vm144, %v103, 0
  %148 = vmatprep.subr.bf16.mxu0 %v129
  %149 = vmatpush1.bf16.msra.mxu0 %v128
  %150 = vmatprep.subr.bf16.mxu0 %v131
  %151 = vmatpush1.bf16.msra.mxu0 %v130
  %152 = vmatprep.subr.bf16.mxu0 %v133
  %153 = vmatpush1.bf16.msra.mxu0 %v132
  %154 = vmatprep.subr.bf16.mxu0 %v135
  %155 = vmatpush1.bf16.msra.mxu0 %v134
  %156 = vmatprep.subr.bf16.mxu0 0
  %157 = vmatpush1.bf16.msra.mxu0 0
  %158 = vmatprep.subr.bf16.mxu0 0
  %159 = vmatpush1.bf16.msra.mxu0 0
  %160 = vmatprep.subr.bf16.mxu0 0
  %161 = vmatpush1.bf16.msra.mxu0 0
  %162 = vmatprep.subr.bf16.mxu0 0
  %163 = vmatpush1.bf16.msra.mxu0 0
  %164 = vmatprep.subr.bf16.mxu0 0
  %165 = vmatpush1.bf16.msra.mxu0 0
  %166 = vmatprep.subr.bf16.mxu0 0
  %167 = vmatpush1.bf16.msra.mxu0 0
  %168 = vmatprep.subr.bf16.mxu0 0
  %169 = vmatpush1.bf16.msra.mxu0 0
  %170 = vmatprep.subr.bf16.mxu0 0
  %171 = vmatpush1.bf16.msra.mxu0 0
  %172 = vmatprep.subr.bf16.mxu0 0
  %173 = vmatpush1.bf16.msra.mxu0 0
  %174 = vmatprep.subr.bf16.mxu0 0
  %175 = vmatpush1.bf16.msra.mxu0 0
  %176 = vmatprep.subr.bf16.mxu0 0
  %177 = vmatpush1.bf16.msra.mxu0 0
  %178 = vmatprep.subr.bf16.mxu0 0
  %179 = vmatpush1.bf16.msra.mxu0 0
  %180 = vmatprep.mubr.bf16.mxu0 0
  %181 = vmatmul.mubr.bf16.gmra.mrb[0].mxu0 %v146
  %v182 = vpop.f32.mrb[0].mxu0
  %v183 = vadd.f32 0.0, %v182
  %v184 = vpop.f32.mrb[0].mxu0
  %v185 = vadd.f32 0.0, %v184
  %v186 = vpop.f32.mrb[0].mxu0
  %v187 = vadd.f32 0.0, %v186
  %v188 = vpop.f32.mrb[0].mxu0
  %v189 = vadd.f32 0.0, %v188
  %190 = vdwg.mxu0
  %v191 = vadd.f32 %v48, %v183
  %v192 = vadd.f32 %v52, %v185
  %v193 = vadd.f32 %v48, %v187
  %v194 = vadd.f32 %v52, %v189
  %s195 = scalar_lea.vmem %s1, 64
  %v196 = vld [vmem:[%s195] sm:$0xff]
  %v197 = vld [vmem:[%s195 + $0x8] sm:$0xff]
  %v198 = vld [vmem:[%s195 + $0x10] sm:$0xff]
  %v199 = vld [vmem:[%s195 + $0x18] sm:$0xff]
  %v200 = vld [vmem:[%s195 + $0x20] sm:$0xff]
  %v201 = vld [vmem:[%s195 + $0x28] sm:$0xff]
  %v202 = vld [vmem:[%s195 + $0x30] sm:$0xff]
  %v203 = vld [vmem:[%s195 + $0x38] sm:$0xff]
  %v204 = vpack.c.b16 %v83, %v82
  %v213 = vunpack.c.l.b16 %v196
  %v214 = vunpack.c.h.b16 %v196
  %v215 = vunpack.c.l.b16 %v197
  %v216 = vunpack.c.h.b16 %v197
  %v217 = vunpack.c.l.b16 %v198
  %v218 = vunpack.c.h.b16 %v198
  %v219 = vunpack.c.l.b16 %v199
  %v220 = vunpack.c.h.b16 %v199
  %v221 = vunpack.c.l.b16 %v200
  %v222 = vunpack.c.h.b16 %v200
  %v223 = vunpack.c.l.b16 %v201
  %v224 = vunpack.c.h.b16 %v201
  %v225 = vunpack.c.l.b16 %v202
  %v226 = vunpack.c.h.b16 %v202
  %v227 = vunpack.c.l.b16 %v203
  %v228 = vunpack.c.h.b16 %v203
  %v229 = vpack.c.b16 %v215, %v213
  %v230 = vpack.c.b16 %v216, %v214
  %v231 = vpack.c.b16 %v219, %v217
  %v232 = vpack.c.b16 %v220, %v218
  %v233 = vpack.c.b16 %v223, %v221
  %v234 = vpack.c.b16 %v224, %v222
  %v235 = vpack.c.b16 %v227, %v225
  %v236 = vpack.c.b16 %v228, %v226
  %v246 = vsel %vm144, %v204, 0
  %248 = vmatprep.subr.bf16.mxu0 %v230
  %249 = vmatpush1.bf16.msra.mxu0 %v229
  %250 = vmatprep.subr.bf16.mxu0 %v232
  %251 = vmatpush1.bf16.msra.mxu0 %v231
  %252 = vmatprep.subr.bf16.mxu0 %v234
  %253 = vmatpush1.bf16.msra.mxu0 %v233
  %254 = vmatprep.subr.bf16.mxu0 %v236
  %255 = vmatpush1.bf16.msra.mxu0 %v235
  %256 = vmatprep.subr.bf16.mxu0 0
  %257 = vmatpush1.bf16.msra.mxu0 0
  %258 = vmatprep.subr.bf16.mxu0 0
  %259 = vmatpush1.bf16.msra.mxu0 0
  %260 = vmatprep.subr.bf16.mxu0 0
  %261 = vmatpush1.bf16.msra.mxu0 0
  %262 = vmatprep.subr.bf16.mxu0 0
  %263 = vmatpush1.bf16.msra.mxu0 0
  %264 = vmatprep.subr.bf16.mxu0 0
  %265 = vmatpush1.bf16.msra.mxu0 0
  %266 = vmatprep.subr.bf16.mxu0 0
  %267 = vmatpush1.bf16.msra.mxu0 0
  %268 = vmatprep.subr.bf16.mxu0 0
  %269 = vmatpush1.bf16.msra.mxu0 0
  %270 = vmatprep.subr.bf16.mxu0 0
  %271 = vmatpush1.bf16.msra.mxu0 0
  %272 = vmatprep.subr.bf16.mxu0 0
  %273 = vmatpush1.bf16.msra.mxu0 0
  %274 = vmatprep.subr.bf16.mxu0 0
  %275 = vmatpush1.bf16.msra.mxu0 0
  %276 = vmatprep.subr.bf16.mxu0 0
  %277 = vmatpush1.bf16.msra.mxu0 0
  %278 = vmatprep.subr.bf16.mxu0 0
  %279 = vmatpush1.bf16.msra.mxu0 0
  %280 = vmatprep.mubr.bf16.mxu0 0
  %281 = vmatmul.mubr.bf16.gmra.mrb[0].mxu0 %v246
  %v282 = vpop.f32.mrb[0].mxu0
  %v283 = vadd.f32 0.0, %v282
  %v284 = vpop.f32.mrb[0].mxu0
  %v285 = vadd.f32 0.0, %v284
  %v286 = vpop.f32.mrb[0].mxu0
  %v287 = vadd.f32 0.0, %v286
  %v288 = vpop.f32.mrb[0].mxu0
  %v289 = vadd.f32 0.0, %v288
  %290 = vdwg.mxu0
  %v291 = vadd.f32 %v191, %v283
  %v292 = vadd.f32 %v192, %v285
  %v293 = vadd.f32 %v193, %v287
  %v294 = vadd.f32 %v194, %v289
  %v295 = vld [vmem:[#allocation2 + $0x8] sm:$0xf]
  %v296 = vld [vmem:[#allocation2 + $0xc] sm:$0xf]
  %v297 = vld [vmem:[#allocation2 + $0x10] sm:$0x1]
  %s298 = scalar_lea.vmem %s1, 128
  %v299 = vld [vmem:[%s298] sm:$0xff]
  %v300 = vld [vmem:[%s298 + $0x8] sm:$0xff]
  %v301 = vld [vmem:[%s298 + $0x10] sm:$0xff]
  %v302 = vld [vmem:[%s298 + $0x18] sm:$0xff]
  %v303 = vld [vmem:[%s298 + $0x20] sm:$0xff]
  %v304 = vld [vmem:[%s298 + $0x28] sm:$0xff]
  %v305 = vld [vmem:[%s298 + $0x30] sm:$0xff]
  %v306 = vld [vmem:[%s298 + $0x38] sm:$0xff]
  %v310 = vunpack.c.l.b16 %v295
  %v311 = vunpack.c.l.b16 %v296
  %v312 = vunpack.c.l.b16 %v297
  %v313 = vpack.c.b16 %v311, %v310
  %v314 = vpack.c.b16 %v312, %v312
  %vm315 = vsmask.f32 7424
  %v317 = vshrl.u32 %v313, 16
  %v319 = vshll.u32 %v313, 16
  %v321 = vrot.slane %v319, 1
  %v322 = vor.u32 %v317, %v321
  %v324 = vshll.u32 %v314, 16
  %v326 = vrot.slane %v324, 1
  %v327 = vsel %vm315, %v322, %v326
  %v336 = vunpack.c.l.b16 %v299
  %v337 = vunpack.c.h.b16 %v299
  %v338 = vunpack.c.l.b16 %v300
  %v339 = vunpack.c.h.b16 %v300
  %v340 = vunpack.c.l.b16 %v301
  %v341 = vunpack.c.h.b16 %v301
  %v342 = vunpack.c.l.b16 %v302
  %v343 = vunpack.c.h.b16 %v302
  %v344 = vunpack.c.l.b16 %v303
  %v345 = vunpack.c.h.b16 %v303
  %v346 = vunpack.c.l.b16 %v304
  %v347 = vunpack.c.h.b16 %v304
  %v348 = vunpack.c.l.b16 %v305
  %v349 = vunpack.c.h.b16 %v305
  %v350 = vunpack.c.l.b16 %v306
  %v351 = vunpack.c.h.b16 %v306
  %v352 = vpack.c.b16 %v338, %v336
  %v353 = vpack.c.b16 %v339, %v337
  %v354 = vpack.c.b16 %v342, %v340
  %v355 = vpack.c.b16 %v343, %v341
  %v356 = vpack.c.b16 %v346, %v344
  %v357 = vpack.c.b16 %v347, %v345
  %v358 = vpack.c.b16 %v350, %v348
  %v359 = vpack.c.b16 %v351, %v349
  %v369 = vsel %vm144, %v327, 0
  %371 = vmatprep.subr.bf16.mxu0 %v353
  %372 = vmatpush1.bf16.msra.mxu0 %v352
  %373 = vmatprep.subr.bf16.mxu0 %v355
  %374 = vmatpush1.bf16.msra.mxu0 %v354
  %375 = vmatprep.subr.bf16.mxu0 %v357
  %376 = vmatpush1.bf16.msra.mxu0 %v356
  %377 = vmatprep.subr.bf16.mxu0 %v359
  %378 = vmatpush1.bf16.msra.mxu0 %v358
  %379 = vmatprep.subr.bf16.mxu0 0
  %380 = vmatpush1.bf16.msra.mxu0 0
  %381 = vmatprep.subr.bf16.mxu0 0
  %382 = vmatpush1.bf16.msra.mxu0 0
  %383 = vmatprep.subr.bf16.mxu0 0
  %384 = vmatpush1.bf16.msra.mxu0 0
  %385 = vmatprep.subr.bf16.mxu0 0
  %386 = vmatpush1.bf16.msra.mxu0 0
  %387 = vmatprep.subr.bf16.mxu0 0
  %388 = vmatpush1.bf16.msra.mxu0 0
  %389 = vmatprep.subr.bf16.mxu0 0
  %390 = vmatpush1.bf16.msra.mxu0 0
  %391 = vmatprep.subr.bf16.mxu0 0
  %392 = vmatpush1.bf16.msra.mxu0 0
  %393 = vmatprep.subr.bf16.mxu0 0
  %394 = vmatpush1.bf16.msra.mxu0 0
  %395 = vmatprep.subr.bf16.mxu0 0
  %396 = vmatpush1.bf16.msra.mxu0 0
  %397 = vmatprep.subr.bf16.mxu0 0
  %398 = vmatpush1.bf16.msra.mxu0 0
  %399 = vmatprep.subr.bf16.mxu0 0
  %400 = vmatpush1.bf16.msra.mxu0 0
  %401 = vmatprep.subr.bf16.mxu0 0
  %402 = vmatpush1.bf16.msra.mxu0 0
  %403 = vmatprep.mubr.bf16.mxu0 0
  %404 = vmatmul.mubr.bf16.gmra.mrb[0].mxu0 %v369
  %v405 = vpop.f32.mrb[0].mxu0
  %v406 = vadd.f32 0.0, %v405
  %v407 = vpop.f32.mrb[0].mxu0
  %v408 = vadd.f32 0.0, %v407
  %v409 = vpop.f32.mrb[0].mxu0
  %v410 = vadd.f32 0.0, %v409
  %v411 = vpop.f32.mrb[0].mxu0
  %v412 = vadd.f32 0.0, %v411
  %413 = vdwg.mxu0
  %v414 = vadd.f32 %v291, %v406
  %v415 = vadd.f32 %v292, %v408
  %v416 = vadd.f32 %v293, %v410
  %v417 = vadd.f32 %v294, %v412
  %v418 = vmax.f32 %v415, 0.0
  %v419 = vmax.f32 %v417, 0.0
  %v420 = vpack.c.bf16 %v419, %v418
  %v422 = vunpack.c.l.b16 %v420
  %v423 = vunpack.c.h.b16 %v420
  %v424 = vpack.c.b16 %v422, %v422
  %v425 = vpack.c.b16 %v423, %v423
  %428 = vst [vmem:[#allocation3 + $0x8] sm:$0xf] %v424
  %429 = vst [vmem:[#allocation3 + $0xc] sm:$0xf] %v425
  %v430 = vld [vmem:[#allocation3 + $0x4] sm:$0x8]
  %v431 = vld [vmem:[#allocation3 + $0x8] sm:$0xf]
  %v432 = vld [vmem:[#allocation3 + $0xc] sm:$0xf]
  %v433 = vld [vmem:[%s2] sm:$0xf]
  %v434 = vld [vmem:[%s2 + $0x4] sm:$0xf]
  %v435 = vld [vmem:[%s2 + $0x8] sm:$0xf]
  %v436 = vld [vmem:[%s2 + $0xc] sm:$0xf]
  %v437 = vld [vmem:[%s2 + $0x10] sm:$0xf]
  %v438 = vld [vmem:[%s2 + $0x14] sm:$0xf]
  %v439 = vld [vmem:[%s2 + $0x18] sm:$0xf]
  %v440 = vld [vmem:[%s2 + $0x1c] sm:$0xf]
  %v441 = vld [vmem:[%s2 + $0x20] sm:$0xf]
  %v442 = vld [vmem:[%s2 + $0x24] sm:$0xf]
  %v443 = vld [vmem:[%s2 + $0x28] sm:$0xf]
  %v444 = vld [vmem:[%s2 + $0x2c] sm:$0xf]
  %v445 = vld [vmem:[%s2 + $0x30] sm:$0xf]
  %v446 = vld [vmem:[%s2 + $0x34] sm:$0xf]
  %v447 = vld [vmem:[%s2 + $0x38] sm:$0xf]
  %v448 = vld [vmem:[%s2 + $0x3c] sm:$0xf]
  %v452 = vunpack.c.l.b16 %v430
  %v453 = vunpack.c.l.b16 %v431
  %v454 = vunpack.c.l.b16 %v432
  %v455 = vpack.c.b16 %v453, %v452
  %v456 = vpack.c.b16 %v454, %v454
  %v458 = vshrl.u32 %v455, 16
  %v460 = vrot.slane %v458, 3
  %v461 = vshll.u32 %v455, 16
  %v463 = vrot.slane %v461, 4
  %v464 = vor.u32 %v460, %v463
  %v466 = vshrl.u32 %v456, 16
  %v468 = vrot.slane %v466, 3
  %v469 = vshll.u32 %v456, 16
  %v471 = vrot.slane %v469, 4
  %v472 = vor.u32 %v468, %v471
  %v473 = vsel %vm86, %v464, %v472
  %v491 = vunpack.c.l.b16 %v433
  %v492 = vunpack.c.l.b16 %v434
  %v493 = vunpack.c.l.b16 %v435
  %v494 = vunpack.c.l.b16 %v436
  %v495 = vunpack.c.l.b16 %v437
  %v496 = vunpack.c.l.b16 %v438
  %v497 = vunpack.c.l.b16 %v439
  %v498 = vunpack.c.l.b16 %v440
  %v499 = vunpack.c.l.b16 %v441
  %v500 = vunpack.c.l.b16 %v442
  %v501 = vunpack.c.l.b16 %v443
  %v502 = vunpack.c.l.b16 %v444
  %v503 = vunpack.c.l.b16 %v445
  %v504 = vunpack.c.l.b16 %v446
  %v505 = vunpack.c.l.b16 %v447
  %v506 = vunpack.c.l.b16 %v448
  %v507 = vpack.c.b16 %v492, %v491
  %v508 = vpack.c.b16 %v494, %v493
  %v509 = vpack.c.b16 %v496, %v495
  %v510 = vpack.c.b16 %v498, %v497
  %v511 = vpack.c.b16 %v500, %v499
  %v512 = vpack.c.b16 %v502, %v501
  %v513 = vpack.c.b16 %v504, %v503
  %v514 = vpack.c.b16 %v506, %v505
  %523 = vmatprep.subr.bf16.mxu0 0
  %524 = vmatpush1.bf16.msra.mxu0 %v507
  %525 = vmatprep.subr.bf16.mxu0 0
  %526 = vmatpush1.bf16.msra.mxu0 %v508
  %527 = vmatprep.subr.bf16.mxu0 0
  %528 = vmatpush1.bf16.msra.mxu0 %v509
  %529 = vmatprep.subr.bf16.mxu0 0
  %530 = vmatpush1.bf16.msra.mxu0 %v510
  %531 = vmatprep.subr.bf16.mxu0 0
  %532 = vmatpush1.bf16.msra.mxu0 %v511
  %533 = vmatprep.subr.bf16.mxu0 0
  %534 = vmatpush1.bf16.msra.mxu0 %v512
  %535 = vmatprep.subr.bf16.mxu0 0
  %536 = vmatpush1.bf16.msra.mxu0 %v513
  %537 = vmatprep.subr.bf16.mxu0 0
  %538 = vmatpush1.bf16.msra.mxu0 %v514
  %539 = vmatprep.subr.bf16.mxu0 0
  %540 = vmatpush1.bf16.msra.mxu0 0
  %541 = vmatprep.subr.bf16.mxu0 0
  %542 = vmatpush1.bf16.msra.mxu0 0
  %543 = vmatprep.subr.bf16.mxu0 0
  %544 = vmatpush1.bf16.msra.mxu0 0
  %545 = vmatprep.subr.bf16.mxu0 0
  %546 = vmatpush1.bf16.msra.mxu0 0
  %547 = vmatprep.subr.bf16.mxu0 0
  %548 = vmatpush1.bf16.msra.mxu0 0
  %549 = vmatprep.subr.bf16.mxu0 0
  %550 = vmatpush1.bf16.msra.mxu0 0
  %551 = vmatprep.subr.bf16.mxu0 0
  %552 = vmatpush1.bf16.msra.mxu0 0
  %553 = vmatprep.subr.bf16.mxu0 0
  %554 = vmatpush1.bf16.msra.mxu0 0
  %555 = vmatprep.mubr.bf16.mxu0 0
  %556 = vmatmul.mubr.bf16.gmra.mrb[0].mxu0 %v473
  %v557 = vpop.f32.mrb[0].mxu0
  %v558 = vadd.f32 0.0, %v557
  %v559 = vpop.f32.mrb[0].mxu0
  %v560 = vpop.f32.mrb[0].mxu0
  %v561 = vadd.f32 0.0, %v560
  %v562 = vpop.f32.mrb[0].mxu0
  %563 = vdwg.mxu0
  %v564 = vadd.f32 %v60, %v558
  %v565 = vadd.f32 %v60, %v561
  %s566 = scalar_lea.vmem %s2, 64
  %v567 = vld [vmem:[%s566] sm:$0xf]
  %v568 = vld [vmem:[%s566 + $0x4] sm:$0xf]
  %v569 = vld [vmem:[%s566 + $0x8] sm:$0xf]
  %v570 = vld [vmem:[%s566 + $0xc] sm:$0xf]
  %v571 = vld [vmem:[%s566 + $0x10] sm:$0xf]
  %v572 = vld [vmem:[%s566 + $0x14] sm:$0xf]
  %v573 = vld [vmem:[%s566 + $0x18] sm:$0xf]
  %v574 = vld [vmem:[%s566 + $0x1c] sm:$0xf]
  %v575 = vld [vmem:[%s566 + $0x20] sm:$0xf]
  %v576 = vld [vmem:[%s566 + $0x24] sm:$0xf]
  %v577 = vld [vmem:[%s566 + $0x28] sm:$0xf]
  %v578 = vld [vmem:[%s566 + $0x2c] sm:$0xf]
  %v579 = vld [vmem:[%s566 + $0x30] sm:$0xf]
  %v580 = vld [vmem:[%s566 + $0x34] sm:$0xf]
  %v581 = vld [vmem:[%s566 + $0x38] sm:$0xf]
  %v582 = vld [vmem:[%s566 + $0x3c] sm:$0xf]
  %v583 = vpack.c.b16 %v454, %v453
  %v601 = vunpack.c.l.b16 %v567
  %v602 = vunpack.c.l.b16 %v568
  %v603 = vunpack.c.l.b16 %v569
  %v604 = vunpack.c.l.b16 %v570
  %v605 = vunpack.c.l.b16 %v571
  %v606 = vunpack.c.l.b16 %v572
  %v607 = vunpack.c.l.b16 %v573
  %v608 = vunpack.c.l.b16 %v574
  %v609 = vunpack.c.l.b16 %v575
  %v610 = vunpack.c.l.b16 %v576
  %v611 = vunpack.c.l.b16 %v577
  %v612 = vunpack.c.l.b16 %v578
  %v613 = vunpack.c.l.b16 %v579
  %v614 = vunpack.c.l.b16 %v580
  %v615 = vunpack.c.l.b16 %v581
  %v616 = vunpack.c.l.b16 %v582
  %v617 = vpack.c.b16 %v602, %v601
  %v618 = vpack.c.b16 %v604, %v603
  %v619 = vpack.c.b16 %v606, %v605
  %v620 = vpack.c.b16 %v608, %v607
  %v621 = vpack.c.b16 %v610, %v609
  %v622 = vpack.c.b16 %v612, %v611
  %v623 = vpack.c.b16 %v614, %v613
  %v624 = vpack.c.b16 %v616, %v615
  %633 = vmatprep.subr.bf16.mxu0 0
  %634 = vmatpush1.bf16.msra.mxu0 %v617
  %635 = vmatprep.subr.bf16.mxu0 0
  %636 = vmatpush1.bf16.msra.mxu0 %v618
  %637 = vmatprep.subr.bf16.mxu0 0
  %638 = vmatpush1.bf16.msra.mxu0 %v619
  %639 = vmatprep.subr.bf16.mxu0 0
  %640 = vmatpush1.bf16.msra.mxu0 %v620
  %641 = vmatprep.subr.bf16.mxu0 0
  %642 = vmatpush1.bf16.msra.mxu0 %v621
  %643 = vmatprep.subr.bf16.mxu0 0
  %644 = vmatpush1.bf16.msra.mxu0 %v622
  %645 = vmatprep.subr.bf16.mxu0 0
  %646 = vmatpush1.bf16.msra.mxu0 %v623
  %647 = vmatprep.subr.bf16.mxu0 0
  %648 = vmatpush1.bf16.msra.mxu0 %v624
  %649 = vmatprep.subr.bf16.mxu0 0
  %650 = vmatpush1.bf16.msra.mxu0 0
  %651 = vmatprep.subr.bf16.mxu0 0
  %652 = vmatpush1.bf16.msra.mxu0 0
  %653 = vmatprep.subr.bf16.mxu0 0
  %654 = vmatpush1.bf16.msra.mxu0 0
  %655 = vmatprep.subr.bf16.mxu0 0
  %656 = vmatpush1.bf16.msra.mxu0 0
  %657 = vmatprep.subr.bf16.mxu0 0
  %658 = vmatpush1.bf16.msra.mxu0 0
  %659 = vmatprep.subr.bf16.mxu0 0
  %660 = vmatpush1.bf16.msra.mxu0 0
  %661 = vmatprep.subr.bf16.mxu0 0
  %662 = vmatpush1.bf16.msra.mxu0 0
  %663 = vmatprep.subr.bf16.mxu0 0
  %664 = vmatpush1.bf16.msra.mxu0 0
  %665 = vmatprep.mubr.bf16.mxu0 0
  %666 = vmatmul.mubr.bf16.gmra.mrb[0].mxu0 %v583
  %v667 = vpop.f32.mrb[0].mxu0
  %v668 = vadd.f32 0.0, %v667
  %v669 = vpop.f32.mrb[0].mxu0
  %v670 = vpop.f32.mrb[0].mxu0
  %v671 = vadd.f32 0.0, %v670
  %v672 = vpop.f32.mrb[0].mxu0
  %673 = vdwg.mxu0
  %v674 = vadd.f32 %v564, %v668
  %v675 = vadd.f32 %v565, %v671
  %v676 = vld [vmem:[#allocation3 + $0x8] sm:$0xf]
  %v677 = vld [vmem:[#allocation3 + $0xc] sm:$0xf]
  %v678 = vld [vmem:[#allocation3 + $0x10] sm:$0x1]
  %s679 = scalar_lea.vmem %s2, 128
  %v680 = vld [vmem:[%s679] sm:$0xf]
  %v681 = vld [vmem:[%s679 + $0x4] sm:$0xf]
  %v682 = vld [vmem:[%s679 + $0x8] sm:$0xf]
  %v683 = vld [vmem:[%s679 + $0xc] sm:$0xf]
  %v684 = vld [vmem:[%s679 + $0x10] sm:$0xf]
  %v685 = vld [vmem:[%s679 + $0x14] sm:$0xf]
  %v686 = vld [vmem:[%s679 + $0x18] sm:$0xf]
  %v687 = vld [vmem:[%s679 + $0x1c] sm:$0xf]
  %v688 = vld [vmem:[%s679 + $0x20] sm:$0xf]
  %v689 = vld [vmem:[%s679 + $0x24] sm:$0xf]
  %v690 = vld [vmem:[%s679 + $0x28] sm:$0xf]
  %v691 = vld [vmem:[%s679 + $0x2c] sm:$0xf]
  %v692 = vld [vmem:[%s679 + $0x30] sm:$0xf]
  %v693 = vld [vmem:[%s679 + $0x34] sm:$0xf]
  %v694 = vld [vmem:[%s679 + $0x38] sm:$0xf]
  %v695 = vld [vmem:[%s679 + $0x3c] sm:$0xf]
  %v699 = vunpack.c.l.b16 %v676
  %v700 = vunpack.c.l.b16 %v677
  %v701 = vunpack.c.l.b16 %v678
  %v702 = vpack.c.b16 %v700, %v699
  %v703 = vpack.c.b16 %v701, %v701
  %v705 = vshrl.u32 %v702, 16
  %v707 = vshll.u32 %v702, 16
  %v709 = vrot.slane %v707, 1
  %v710 = vor.u32 %v705, %v709
  %v712 = vshll.u32 %v703, 16
  %v714 = vrot.slane %v712, 1
  %v715 = vsel %vm315, %v710, %v714
  %v733 = vunpack.c.l.b16 %v680
  %v734 = vunpack.c.l.b16 %v681
  %v735 = vunpack.c.l.b16 %v682
  %v736 = vunpack.c.l.b16 %v683
  %v737 = vunpack.c.l.b16 %v684
  %v738 = vunpack.c.l.b16 %v685
  %v739 = vunpack.c.l.b16 %v686
  %v740 = vunpack.c.l.b16 %v687
  %v741 = vunpack.c.l.b16 %v688
  %v742 = vunpack.c.l.b16 %v689
  %v743 = vunpack.c.l.b16 %v690
  %v744 = vunpack.c.l.b16 %v691
  %v745 = vunpack.c.l.b16 %v692
  %v746 = vunpack.c.l.b16 %v693
  %v747 = vunpack.c.l.b16 %v694
  %v748 = vunpack.c.l.b16 %v695
  %v749 = vpack.c.b16 %v734, %v733
  %v750 = vpack.c.b16 %v736, %v735
  %v751 = vpack.c.b16 %v738, %v737
  %v752 = vpack.c.b16 %v740, %v739
  %v753 = vpack.c.b16 %v742, %v741
  %v754 = vpack.c.b16 %v744, %v743
  %v755 = vpack.c.b16 %v746, %v745
  %v756 = vpack.c.b16 %v748, %v747
  %765 = vmatprep.subr.bf16.mxu0 0
  %766 = vmatpush1.bf16.msra.mxu0 %v749
  %767 = vmatprep.subr.bf16.mxu0 0
  %768 = vmatpush1.bf16.msra.mxu0 %v750
  %769 = vmatprep.subr.bf16.mxu0 0
  %770 = vmatpush1.bf16.msra.mxu0 %v751
  %771 = vmatprep.subr.bf16.mxu0 0
  %772 = vmatpush1.bf16.msra.mxu0 %v752
  %773 = vmatprep.subr.bf16.mxu0 0
  %774 = vmatpush1.bf16.msra.mxu0 %v753
  %775 = vmatprep.subr.bf16.mxu0 0
  %776 = vmatpush1.bf16.msra.mxu0 %v754
  %777 = vmatprep.subr.bf16.mxu0 0
  %778 = vmatpush1.bf16.msra.mxu0 %v755
  %779 = vmatprep.subr.bf16.mxu0 0
  %780 = vmatpush1.bf16.msra.mxu0 %v756
  %781 = vmatprep.subr.bf16.mxu0 0
  %782 = vmatpush1.bf16.msra.mxu0 0
  %783 = vmatprep.subr.bf16.mxu0 0
  %784 = vmatpush1.bf16.msra.mxu0 0
  %785 = vmatprep.subr.bf16.mxu0 0
  %786 = vmatpush1.bf16.msra.mxu0 0
  %787 = vmatprep.subr.bf16.mxu0 0
  %788 = vmatpush1.bf16.msra.mxu0 0
  %789 = vmatprep.subr.bf16.mxu0 0
  %790 = vmatpush1.bf16.msra.mxu0 0
  %791 = vmatprep.subr.bf16.mxu0 0
  %792 = vmatpush1.bf16.msra.mxu0 0
  %793 = vmatprep.subr.bf16.mxu0 0
  %794 = vmatpush1.bf16.msra.mxu0 0
  %795 = vmatprep.subr.bf16.mxu0 0
  %796 = vmatpush1.bf16.msra.mxu0 0
  %797 = vmatprep.mubr.bf16.mxu0 0
  %798 = vmatmul.mubr.bf16.gmra.mrb[0].mxu0 %v715
  %v799 = vpop.f32.mrb[0].mxu0
  %v800 = vadd.f32 0.0, %v799
  %v801 = vpop.f32.mrb[0].mxu0
  %v802 = vpop.f32.mrb[0].mxu0
  %v803 = vadd.f32 0.0, %v802
  %v804 = vpop.f32.mrb[0].mxu0
  %805 = vdwg.mxu0
  %v806 = vadd.f32 %v674, %v800
  %v807 = vadd.f32 %v675, %v803
  %v808 = vmax.f32 %v806, 0.0
  %v809 = vmax.f32 %v807, 0.0
  %v810 = vadd.f32 %v808, %v414
  %v811 = vadd.f32 %v809, %v416
  %812 = vst [vmem:[%s5] sm:$0xff] %v810
  %813 = vst [vmem:[%s5 + $0x8] sm:$0xff] %v811
  %s814 = scalar_lea.vmem %s0, 8
  %v815 = vld [vmem:[%s814] sm:$0xf]
  %v816 = vld [vmem:[%s814 + $0x4] sm:$0xf]
  %817 = vst.msk [vmem:[#allocation2 + $0x8] sm:$0xf] %vm64, %v815
  %818 = vst.msk [vmem:[#allocation2 + $0xc] sm:$0xf] %vm64, %v816
  %v819 = vld [vmem:[#allocation2 + $0x4] sm:$0x8]
  %v820 = vld [vmem:[#allocation2 + $0x8] sm:$0xf]
  %v821 = vld [vmem:[#allocation2 + $0xc] sm:$0xf]
  %v822 = vld [vmem:[%s1] sm:$0xff]
  %v823 = vld [vmem:[%s1 + $0x8] sm:$0xff]
  %v824 = vld [vmem:[%s1 + $0x10] sm:$0xff]
  %v825 = vld [vmem:[%s1 + $0x18] sm:$0xff]
  %v826 = vld [vmem:[%s1 + $0x20] sm:$0xff]
  %v827 = vld [vmem:[%s1 + $0x28] sm:$0xff]
  %v828 = vld [vmem:[%s1 + $0x30] sm:$0xff]
  %v829 = vld [vmem:[%s1 + $0x38] sm:$0xff]
  %v833 = vunpack.c.l.b16 %v819
  %v834 = vunpack.c.l.b16 %v820
  %v835 = vunpack.c.l.b16 %v821
  %v836 = vpack.c.b16 %v834, %v833
  %v837 = vpack.c.b16 %v835, %v835
  %v839 = vshrl.u32 %v836, 16
  %v841 = vrot.slane %v839, 3
  %v842 = vshll.u32 %v836, 16
  %v844 = vrot.slane %v842, 4
  %v845 = vor.u32 %v841, %v844
  %v847 = vshrl.u32 %v837, 16
  %v849 = vrot.slane %v847, 3
  %v850 = vshll.u32 %v837, 16
  %v852 = vrot.slane %v850, 4
  %v853 = vor.u32 %v849, %v852
  %v854 = vsel %vm86, %v845, %v853
  %v863 = vunpack.c.l.b16 %v822
  %v864 = vunpack.c.h.b16 %v822
  %v865 = vunpack.c.l.b16 %v823
  %v866 = vunpack.c.h.b16 %v823
  %v867 = vunpack.c.l.b16 %v824
  %v868 = vunpack.c.h.b16 %v824
  %v869 = vunpack.c.l.b16 %v825
  %v870 = vunpack.c.h.b16 %v825
  %v871 = vunpack.c.l.b16 %v826
  %v872 = vunpack.c.h.b16 %v826
  %v873 = vunpack.c.l.b16 %v827
  %v874 = vunpack.c.h.b16 %v827
  %v875 = vunpack.c.l.b16 %v828
  %v876 = vunpack.c.h.b16 %v828
  %v877 = vunpack.c.l.b16 %v829
  %v878 = vunpack.c.h.b16 %v829
  %v879 = vpack.c.b16 %v865, %v863
  %v880 = vpack.c.b16 %v866, %v864
  %v881 = vpack.c.b16 %v869, %v867
  %v882 = vpack.c.b16 %v870, %v868
  %v883 = vpack.c.b16 %v873, %v871
  %v884 = vpack.c.b16 %v874, %v872
  %v885 = vpack.c.b16 %v877, %v875
  %v886 = vpack.c.b16 %v878, %v876
  %v896 = vsel %vm144, %v854, 0
  %898 = vmatprep.subr.bf16.mxu0 %v880
  %899 = vmatpush1.bf16.msra.mxu0 %v879
  %900 = vmatprep.subr.bf16.mxu0 %v882
  %901 = vmatpush1.bf16.msra.mxu0 %v881
  %902 = vmatprep.subr.bf16.mxu0 %v884
  %903 = vmatpush1.bf16.msra.mxu0 %v883
  %904 = vmatprep.subr.bf16.mxu0 %v886
  %905 = vmatpush1.bf16.msra.mxu0 %v885
  %906 = vmatprep.subr.bf16.mxu0 0
  %907 = vmatpush1.bf16.msra.mxu0 0
  %908 = vmatprep.subr.bf16.mxu0 0
  %909 = vmatpush1.bf16.msra.mxu0 0
  %910 = vmatprep.subr.bf16.mxu0 0
  %911 = vmatpush1.bf16.msra.mxu0 0
  %912 = vmatprep.subr.bf16.mxu0 0
  %913 = vmatpush1.bf16.msra.mxu0 0
  %914 = vmatprep.subr.bf16.mxu0 0
  %915 = vmatpush1.bf16.msra.mxu0 0
  %916 = vmatprep.subr.bf16.mxu0 0
  %917 = vmatpush1.bf16.msra.mxu0 0
  %918 = vmatprep.subr.bf16.mxu0 0
  %919 = vmatpush1.bf16.msra.mxu0 0
  %920 = vmatprep.subr.bf16.mxu0 0
  %921 = vmatpush1.bf16.msra.mxu0 0
  %922 = vmatprep.subr.bf16.mxu0 0
  %923 = vmatpush1.bf16.msra.mxu0 0
  %924 = vmatprep.subr.bf16.mxu0 0
  %925 = vmatpush1.bf16.msra.mxu0 0
  %926 = vmatprep.subr.bf16.mxu0 0
  %927 = vmatpush1.bf16.msra.mxu0 0
  %928 = vmatprep.subr.bf16.mxu0 0
  %929 = vmatpush1.bf16.msra.mxu0 0
  %930 = vmatprep.mubr.bf16.mxu0 0
  %931 = vmatmul.mubr.bf16.gmra.mrb[0].mxu0 %v896
  %v932 = vpop.f32.mrb[0].mxu0
  %v933 = vadd.f32 0.0, %v932
  %v934 = vpop.f32.mrb[0].mxu0
  %v935 = vadd.f32 0.0, %v934
  %v936 = vpop.f32.mrb[0].mxu0
  %v937 = vadd.f32 0.0, %v936
  %v938 = vpop.f32.mrb[0].mxu0
  %v939 = vadd.f32 0.0, %v938
  %940 = vdwg.mxu0
  %v941 = vadd.f32 %v48, %v933
  %v942 = vadd.f32 %v52, %v935
  %v943 = vadd.f32 %v48, %v937
  %v944 = vadd.f32 %v52, %v939
  %v945 = vld [vmem:[%s195] sm:$0xff]
  %v946 = vld [vmem:[%s195 + $0x8] sm:$0xff]
  %v947 = vld [vmem:[%s195 + $0x10] sm:$0xff]
  %v948 = vld [vmem:[%s195 + $0x18] sm:$0xff]
  %v949 = vld [vmem:[%s195 + $0x20] sm:$0xff]
  %v950 = vld [vmem:[%s195 + $0x28] sm:$0xff]
  %v951 = vld [vmem:[%s195 + $0x30] sm:$0xff]
  %v952 = vld [vmem:[%s195 + $0x38] sm:$0xff]
  %v953 = vpack.c.b16 %v835, %v834
  %v962 = vunpack.c.l.b16 %v945
  %v963 = vunpack.c.h.b16 %v945
  %v964 = vunpack.c.l.b16 %v946
  %v965 = vunpack.c.h.b16 %v946
  %v966 = vunpack.c.l.b16 %v947
  %v967 = vunpack.c.h.b16 %v947
  %v968 = vunpack.c.l.b16 %v948
  %v969 = vunpack.c.h.b16 %v948
  %v970 = vunpack.c.l.b16 %v949
  %v971 = vunpack.c.h.b16 %v949
  %v972 = vunpack.c.l.b16 %v950
  %v973 = vunpack.c.h.b16 %v950
  %v974 = vunpack.c.l.b16 %v951
  %v975 = vunpack.c.h.b16 %v951
  %v976 = vunpack.c.l.b16 %v952
  %v977 = vunpack.c.h.b16 %v952
  %v978 = vpack.c.b16 %v964, %v962
  %v979 = vpack.c.b16 %v965, %v963
  %v980 = vpack.c.b16 %v968, %v966
  %v981 = vpack.c.b16 %v969, %v967
  %v982 = vpack.c.b16 %v972, %v970
  %v983 = vpack.c.b16 %v973, %v971
  %v984 = vpack.c.b16 %v976, %v974
  %v985 = vpack.c.b16 %v977, %v975
  %v995 = vsel %vm144, %v953, 0
  %997 = vmatprep.subr.bf16.mxu0 %v979
  %998 = vmatpush1.bf16.msra.mxu0 %v978
  %999 = vmatprep.subr.bf16.mxu0 %v981
  %1000 = vmatpush1.bf16.msra.mxu0 %v980
  %1001 = vmatprep.subr.bf16.mxu0 %v983
  %1002 = vmatpush1.bf16.msra.mxu0 %v982
  %1003 = vmatprep.subr.bf16.mxu0 %v985
  %1004 = vmatpush1.bf16.msra.mxu0 %v984
  %1005 = vmatprep.subr.bf16.mxu0 0
  %1006 = vmatpush1.bf16.msra.mxu0 0
  %1007 = vmatprep.subr.bf16.mxu0 0
  %1008 = vmatpush1.bf16.msra.mxu0 0
  %1009 = vmatprep.subr.bf16.mxu0 0
  %1010 = vmatpush1.bf16.msra.mxu0 0
  %1011 = vmatprep.subr.bf16.mxu0 0
  %1012 = vmatpush1.bf16.msra.mxu0 0
  %1013 = vmatprep.subr.bf16.mxu0 0
  %1014 = vmatpush1.bf16.msra.mxu0 0
  %1015 = vmatprep.subr.bf16.mxu0 0
  %1016 = vmatpush1.bf16.msra.mxu0 0
  %1017 = vmatprep.subr.bf16.mxu0 0
  %1018 = vmatpush1.bf16.msra.mxu0 0
  %1019 = vmatprep.subr.bf16.mxu0 0
  %1020 = vmatpush1.bf16.msra.mxu0 0
  %1021 = vmatprep.subr.bf16.mxu0 0
  %1022 = vmatpush1.bf16.msra.mxu0 0
  %1023 = vmatprep.subr.bf16.mxu0 0
  %1024 = vmatpush1.bf16.msra.mxu0 0
  %1025 = vmatprep.subr.bf16.mxu0 0
  %1026 = vmatpush1.bf16.msra.mxu0 0
  %1027 = vmatprep.subr.bf16.mxu0 0
  %1028 = vmatpush1.bf16.msra.mxu0 0
  %1029 = vmatprep.mubr.bf16.mxu0 0
  %1030 = vmatmul.mubr.bf16.gmra.mrb[0].mxu0 %v995
  %v1031 = vpop.f32.mrb[0].mxu0
  %v1032 = vadd.f32 0.0, %v1031
  %v1033 = vpop.f32.mrb[0].mxu0
  %v1034 = vadd.f32 0.0, %v1033
  %v1035 = vpop.f32.mrb[0].mxu0
  %v1036 = vadd.f32 0.0, %v1035
  %v1037 = vpop.f32.mrb[0].mxu0
  %v1038 = vadd.f32 0.0, %v1037
  %1039 = vdwg.mxu0
  %v1040 = vadd.f32 %v941, %v1032
  %v1041 = vadd.f32 %v942, %v1034
  %v1042 = vadd.f32 %v943, %v1036
  %v1043 = vadd.f32 %v944, %v1038
  %v1044 = vld [vmem:[#allocation2 + $0x8] sm:$0xf]
  %v1045 = vld [vmem:[#allocation2 + $0xc] sm:$0xf]
  %v1046 = vld [vmem:[#allocation2 + $0x10] sm:$0x1]
  %v1047 = vld [vmem:[%s298] sm:$0xff]
  %v1048 = vld [vmem:[%s298 + $0x8] sm:$0xff]
  %v1049 = vld [vmem:[%s298 + $0x10] sm:$0xff]
  %v1050 = vld [vmem:[%s298 + $0x18] sm:$0xff]
  %v1051 = vld [vmem:[%s298 + $0x20] sm:$0xff]
  %v1052 = vld [vmem:[%s298 + $0x28] sm:$0xff]
  %v1053 = vld [vmem:[%s298 + $0x30] sm:$0xff]
  %v1054 = vld [vmem:[%s298 + $0x38] sm:$0xff]
  %v1058 = vunpack.c.l.b16 %v1044
  %v1059 = vunpack.c.l.b16 %v1045
  %v1060 = vunpack.c.l.b16 %v1046
  %v1061 = vpack.c.b16 %v1059, %v1058
  %v1062 = vpack.c.b16 %v1060, %v1060
  %v1064 = vshrl.u32 %v1061, 16
  %v1066 = vshll.u32 %v1061, 16
  %v1068 = vrot.slane %v1066, 1
  %v1069 = vor.u32 %v1064, %v1068
  %v1071 = vshll.u32 %v1062, 16
  %v1073 = vrot.slane %v1071, 1
  %v1074 = vsel %vm315, %v1069, %v1073
  %v1083 = vunpack.c.l.b16 %v1047
  %v1084 = vunpack.c.h.b16 %v1047
  %v1085 = vunpack.c.l.b16 %v1048
  %v1086 = vunpack.c.h.b16 %v1048
  %v1087 = vunpack.c.l.b16 %v1049
  %v1088 = vunpack.c.h.b16 %v1049
  %v1089 = vunpack.c.l.b16 %v1050
  %v1090 = vunpack.c.h.b16 %v1050
  %v1091 = vunpack.c.l.b16 %v1051
  %v1092 = vunpack.c.h.b16 %v1051
  %v1093 = vunpack.c.l.b16 %v1052
  %v1094 = vunpack.c.h.b16 %v1052
  %v1095 = vunpack.c.l.b16 %v1053
  %v1096 = vunpack.c.h.b16 %v1053
  %v1097 = vunpack.c.l.b16 %v1054
  %v1098 = vunpack.c.h.b16 %v1054
  %v1099 = vpack.c.b16 %v1085, %v1083
  %v1100 = vpack.c.b16 %v1086, %v1084
  %v1101 = vpack.c.b16 %v1089, %v1087
  %v1102 = vpack.c.b16 %v1090, %v1088
  %v1103 = vpack.c.b16 %v1093, %v1091
  %v1104 = vpack.c.b16 %v1094, %v1092
  %v1105 = vpack.c.b16 %v1097, %v1095
  %v1106 = vpack.c.b16 %v1098, %v1096
  %v1116 = vsel %vm144, %v1074, 0
  %1118 = vmatprep.subr.bf16.mxu0 %v1100
  %1119 = vmatpush1.bf16.msra.mxu0 %v1099
  %1120 = vmatprep.subr.bf16.mxu0 %v1102
  %1121 = vmatpush1.bf16.msra.mxu0 %v1101
  %1122 = vmatprep.subr.bf16.mxu0 %v1104
  %1123 = vmatpush1.bf16.msra.mxu0 %v1103
  %1124 = vmatprep.subr.bf16.mxu0 %v1106
  %1125 = vmatpush1.bf16.msra.mxu0 %v1105
  %1126 = vmatprep.subr.bf16.mxu0 0
  %1127 = vmatpush1.bf16.msra.mxu0 0
  %1128 = vmatprep.subr.bf16.mxu0 0
  %1129 = vmatpush1.bf16.msra.mxu0 0
  %1130 = vmatprep.subr.bf16.mxu0 0
  %1131 = vmatpush1.bf16.msra.mxu0 0
  %1132 = vmatprep.subr.bf16.mxu0 0
  %1133 = vmatpush1.bf16.msra.mxu0 0
  %1134 = vmatprep.subr.bf16.mxu0 0
  %1135 = vmatpush1.bf16.msra.mxu0 0
  %1136 = vmatprep.subr.bf16.mxu0 0
  %1137 = vmatpush1.bf16.msra.mxu0 0
  %1138 = vmatprep.subr.bf16.mxu0 0
  %1139 = vmatpush1.bf16.msra.mxu0 0
  %1140 = vmatprep.subr.bf16.mxu0 0
  %1141 = vmatpush1.bf16.msra.mxu0 0
  %1142 = vmatprep.subr.bf16.mxu0 0
  %1143 = vmatpush1.bf16.msra.mxu0 0
  %1144 = vmatprep.subr.bf16.mxu0 0
  %1145 = vmatpush1.bf16.msra.mxu0 0
  %1146 = vmatprep.subr.bf16.mxu0 0
  %1147 = vmatpush1.bf16.msra.mxu0 0
  %1148 = vmatprep.subr.bf16.mxu0 0
  %1149 = vmatpush1.bf16.msra.mxu0 0
  %1150 = vmatprep.mubr.bf16.mxu0 0
  %1151 = vmatmul.mubr.bf16.gmra.mrb[0].mxu0 %v1116
  %v1152 = vpop.f32.mrb[0].mxu0
  %v1153 = vadd.f32 0.0, %v1152
  %v1154 = vpop.f32.mrb[0].mxu0
  %v1155 = vadd.f32 0.0, %v1154
  %v1156 = vpop.f32.mrb[0].mxu0
  %v1157 = vadd.f32 0.0, %v1156
  %v1158 = vpop.f32.mrb[0].mxu0
  %v1159 = vadd.f32 0.0, %v1158
  %1160 = vdwg.mxu0
  %v1161 = vadd.f32 %v1040, %v1153
  %v1162 = vadd.f32 %v1041, %v1155
  %v1163 = vadd.f32 %v1042, %v1157
  %v1164 = vadd.f32 %v1043, %v1159
  %v1165 = vmax.f32 %v1162, 0.0
  %v1166 = vmax.f32 %v1164, 0.0
  %v1167 = vpack.c.bf16 %v1166, %v1165
  %v1169 = vunpack.c.l.b16 %v1167
  %v1170 = vunpack.c.h.b16 %v1167
  %v1171 = vpack.c.b16 %v1169, %v1169
  %v1172 = vpack.c.b16 %v1170, %v1170
  %1175 = vst [vmem:[#allocation3 + $0x8] sm:$0xf] %v1171
  %1176 = vst [vmem:[#allocation3 + $0xc] sm:$0xf] %v1172
  %v1177 = vld [vmem:[#allocation3 + $0x4] sm:$0x8]
  %v1178 = vld [vmem:[#allocation3 + $0x8] sm:$0xf]
  %v1179 = vld [vmem:[#allocation3 + $0xc] sm:$0xf]
  %v1180 = vld [vmem:[%s2] sm:$0xf]
  %v1181 = vld [vmem:[%s2 + $0x4] sm:$0xf]
  %v1182 = vld [vmem:[%s2 + $0x8] sm:$0xf]
  %v1183 = vld [vmem:[%s2 + $0xc] sm:$0xf]
  %v1184 = vld [vmem:[%s2 + $0x10] sm:$0xf]
  %v1185 = vld [vmem:[%s2 + $0x14] sm:$0xf]
  %v1186 = vld [vmem:[%s2 + $0x18] sm:$0xf]
  %v1187 = vld [vmem:[%s2 + $0x1c] sm:$0xf]
  %v1188 = vld [vmem:[%s2 + $0x20] sm:$0xf]
  %v1189 = vld [vmem:[%s2 + $0x24] sm:$0xf]
  %v1190 = vld [vmem:[%s2 + $0x28] sm:$0xf]
  %v1191 = vld [vmem:[%s2 + $0x2c] sm:$0xf]
  %v1192 = vld [vmem:[%s2 + $0x30] sm:$0xf]
  %v1193 = vld [vmem:[%s2 + $0x34] sm:$0xf]
  %v1194 = vld [vmem:[%s2 + $0x38] sm:$0xf]
  %v1195 = vld [vmem:[%s2 + $0x3c] sm:$0xf]
  %v1199 = vunpack.c.l.b16 %v1177
  %v1200 = vunpack.c.l.b16 %v1178
  %v1201 = vunpack.c.l.b16 %v1179
  %v1202 = vpack.c.b16 %v1200, %v1199
  %v1203 = vpack.c.b16 %v1201, %v1201
  %v1205 = vshrl.u32 %v1202, 16
  %v1207 = vrot.slane %v1205, 3
  %v1208 = vshll.u32 %v1202, 16
  %v1210 = vrot.slane %v1208, 4
  %v1211 = vor.u32 %v1207, %v1210
  %v1213 = vshrl.u32 %v1203, 16
  %v1215 = vrot.slane %v1213, 3
  %v1216 = vshll.u32 %v1203, 16
  %v1218 = vrot.slane %v1216, 4
  %v1219 = vor.u32 %v1215, %v1218
  %v1220 = vsel %vm86, %v1211, %v1219
  %v1238 = vunpack.c.l.b16 %v1180
  %v1239 = vunpack.c.l.b16 %v1181
  %v1240 = vunpack.c.l.b16 %v1182
  %v1241 = vunpack.c.l.b16 %v1183
  %v1242 = vunpack.c.l.b16 %v1184
  %v1243 = vunpack.c.l.b16 %v1185
  %v1244 = vunpack.c.l.b16 %v1186
  %v1245 = vunpack.c.l.b16 %v1187
  %v1246 = vunpack.c.l.b16 %v1188
  %v1247 = vunpack.c.l.b16 %v1189
  %v1248 = vunpack.c.l.b16 %v1190
  %v1249 = vunpack.c.l.b16 %v1191
  %v1250 = vunpack.c.l.b16 %v1192
  %v1251 = vunpack.c.l.b16 %v1193
  %v1252 = vunpack.c.l.b16 %v1194
  %v1253 = vunpack.c.l.b16 %v1195
  %v1254 = vpack.c.b16 %v1239, %v1238
  %v1255 = vpack.c.b16 %v1241, %v1240
  %v1256 = vpack.c.b16 %v1243, %v1242
  %v1257 = vpack.c.b16 %v1245, %v1244
  %v1258 = vpack.c.b16 %v1247, %v1246
  %v1259 = vpack.c.b16 %v1249, %v1248
  %v1260 = vpack.c.b16 %v1251, %v1250
  %v1261 = vpack.c.b16 %v1253, %v1252
  %1270 = vmatprep.subr.bf16.mxu0 0
  %1271 = vmatpush1.bf16.msra.mxu0 %v1254
  %1272 = vmatprep.subr.bf16.mxu0 0
  %1273 = vmatpush1.bf16.msra.mxu0 %v1255
  %1274 = vmatprep.subr.bf16.mxu0 0
  %1275 = vmatpush1.bf16.msra.mxu0 %v1256
  %1276 = vmatprep.subr.bf16.mxu0 0
  %1277 = vmatpush1.bf16.msra.mxu0 %v1257
  %1278 = vmatprep.subr.bf16.mxu0 0
  %1279 = vmatpush1.bf16.msra.mxu0 %v1258
  %1280 = vmatprep.subr.bf16.mxu0 0
  %1281 = vmatpush1.bf16.msra.mxu0 %v1259
  %1282 = vmatprep.subr.bf16.mxu0 0
  %1283 = vmatpush1.bf16.msra.mxu0 %v1260
  %1284 = vmatprep.subr.bf16.mxu0 0
  %1285 = vmatpush1.bf16.msra.mxu0 %v1261
  %1286 = vmatprep.subr.bf16.mxu0 0
  %1287 = vmatpush1.bf16.msra.mxu0 0
  %1288 = vmatprep.subr.bf16.mxu0 0
  %1289 = vmatpush1.bf16.msra.mxu0 0
  %1290 = vmatprep.subr.bf16.mxu0 0
  %1291 = vmatpush1.bf16.msra.mxu0 0
  %1292 = vmatprep.subr.bf16.mxu0 0
  %1293 = vmatpush1.bf16.msra.mxu0 0
  %1294 = vmatprep.subr.bf16.mxu0 0
  %1295 = vmatpush1.bf16.msra.mxu0 0
  %1296 = vmatprep.subr.bf16.mxu0 0
  %1297 = vmatpush1.bf16.msra.mxu0 0
  %1298 = vmatprep.subr.bf16.mxu0 0
  %1299 = vmatpush1.bf16.msra.mxu0 0
  %1300 = vmatprep.subr.bf16.mxu0 0
  %1301 = vmatpush1.bf16.msra.mxu0 0
  %1302 = vmatprep.mubr.bf16.mxu0 0
  %1303 = vmatmul.mubr.bf16.gmra.mrb[0].mxu0 %v1220
  %v1304 = vpop.f32.mrb[0].mxu0
  %v1305 = vadd.f32 0.0, %v1304
  %v1306 = vpop.f32.mrb[0].mxu0
  %v1307 = vpop.f32.mrb[0].mxu0
  %v1308 = vadd.f32 0.0, %v1307
  %v1309 = vpop.f32.mrb[0].mxu0
  %1310 = vdwg.mxu0
  %v1311 = vadd.f32 %v60, %v1305
  %v1312 = vadd.f32 %v60, %v1308
  %v1313 = vld [vmem:[%s566] sm:$0xf]
  %v1314 = vld [vmem:[%s566 + $0x4] sm:$0xf]
  %v1315 = vld [vmem:[%s566 + $0x8] sm:$0xf]
  %v1316 = vld [vmem:[%s566 + $0xc] sm:$0xf]
  %v1317 = vld [vmem:[%s566 + $0x10] sm:$0xf]
  %v1318 = vld [vmem:[%s566 + $0x14] sm:$0xf]
  %v1319 = vld [vmem:[%s566 + $0x18] sm:$0xf]
  %v1320 = vld [vmem:[%s566 + $0x1c] sm:$0xf]
  %v1321 = vld [vmem:[%s566 + $0x20] sm:$0xf]
  %v1322 = vld [vmem:[%s566 + $0x24] sm:$0xf]
  %v1323 = vld [vmem:[%s566 + $0x28] sm:$0xf]
  %v1324 = vld [vmem:[%s566 + $0x2c] sm:$0xf]
  %v1325 = vld [vmem:[%s566 + $0x30] sm:$0xf]
  %v1326 = vld [vmem:[%s566 + $0x34] sm:$0xf]
  %v1327 = vld [vmem:[%s566 + $0x38] sm:$0xf]
  %v1328 = vld [vmem:[%s566 + $0x3c] sm:$0xf]
  %v1329 = vpack.c.b16 %v1201, %v1200
  %v1347 = vunpack.c.l.b16 %v1313
  %v1348 = vunpack.c.l.b16 %v1314
  %v1349 = vunpack.c.l.b16 %v1315
  %v1350 = vunpack.c.l.b16 %v1316
  %v1351 = vunpack.c.l.b16 %v1317
  %v1352 = vunpack.c.l.b16 %v1318
  %v1353 = vunpack.c.l.b16 %v1319
  %v1354 = vunpack.c.l.b16 %v1320
  %v1355 = vunpack.c.l.b16 %v1321
  %v1356 = vunpack.c.l.b16 %v1322
  %v1357 = vunpack.c.l.b16 %v1323
  %v1358 = vunpack.c.l.b16 %v1324
  %v1359 = vunpack.c.l.b16 %v1325
  %v1360 = vunpack.c.l.b16 %v1326
  %v1361 = vunpack.c.l.b16 %v1327
  %v1362 = vunpack.c.l.b16 %v1328
  %v1363 = vpack.c.b16 %v1348, %v1347
  %v1364 = vpack.c.b16 %v1350, %v1349
  %v1365 = vpack.c.b16 %v1352, %v1351
  %v1366 = vpack.c.b16 %v1354, %v1353
  %v1367 = vpack.c.b16 %v1356, %v1355
  %v1368 = vpack.c.b16 %v1358, %v1357
  %v1369 = vpack.c.b16 %v1360, %v1359
  %v1370 = vpack.c.b16 %v1362, %v1361
  %1379 = vmatprep.subr.bf16.mxu0 0
  %1380 = vmatpush1.bf16.msra.mxu0 %v1363
  %1381 = vmatprep.subr.bf16.mxu0 0
  %1382 = vmatpush1.bf16.msra.mxu0 %v1364
  %1383 = vmatprep.subr.bf16.mxu0 0
  %1384 = vmatpush1.bf16.msra.mxu0 %v1365
  %1385 = vmatprep.subr.bf16.mxu0 0
  %1386 = vmatpush1.bf16.msra.mxu0 %v1366
  %1387 = vmatprep.subr.bf16.mxu0 0
  %1388 = vmatpush1.bf16.msra.mxu0 %v1367
  %1389 = vmatprep.subr.bf16.mxu0 0
  %1390 = vmatpush1.bf16.msra.mxu0 %v1368
  %1391 = vmatprep.subr.bf16.mxu0 0
  %1392 = vmatpush1.bf16.msra.mxu0 %v1369
  %1393 = vmatprep.subr.bf16.mxu0 0
  %1394 = vmatpush1.bf16.msra.mxu0 %v1370
  %1395 = vmatprep.subr.bf16.mxu0 0
  %1396 = vmatpush1.bf16.msra.mxu0 0
  %1397 = vmatprep.subr.bf16.mxu0 0
  %1398 = vmatpush1.bf16.msra.mxu0 0
  %1399 = vmatprep.subr.bf16.mxu0 0
  %1400 = vmatpush1.bf16.msra.mxu0 0
  %1401 = vmatprep.subr.bf16.mxu0 0
  %1402 = vmatpush1.bf16.msra.mxu0 0
  %1403 = vmatprep.subr.bf16.mxu0 0
  %1404 = vmatpush1.bf16.msra.mxu0 0
  %1405 = vmatprep.subr.bf16.mxu0 0
  %1406 = vmatpush1.bf16.msra.mxu0 0
  %1407 = vmatprep.subr.bf16.mxu0 0
  %1408 = vmatpush1.bf16.msra.mxu0 0
  %1409 = vmatprep.subr.bf16.mxu0 0
  %1410 = vmatpush1.bf16.msra.mxu0 0
  %1411 = vmatprep.mubr.bf16.mxu0 0
  %1412 = vmatmul.mubr.bf16.gmra.mrb[0].mxu0 %v1329
  %v1413 = vpop.f32.mrb[0].mxu0
  %v1414 = vadd.f32 0.0, %v1413
  %v1415 = vpop.f32.mrb[0].mxu0
  %v1416 = vpop.f32.mrb[0].mxu0
  %v1417 = vadd.f32 0.0, %v1416
  %v1418 = vpop.f32.mrb[0].mxu0
  %1419 = vdwg.mxu0
  %v1420 = vadd.f32 %v1311, %v1414
  %v1421 = vadd.f32 %v1312, %v1417
  %v1422 = vld [vmem:[#allocation3 + $0x8] sm:$0xf]
  %v1423 = vld [vmem:[#allocation3 + $0xc] sm:$0xf]
  %v1424 = vld [vmem:[#allocation3 + $0x10] sm:$0x1]
  %v1425 = vld [vmem:[%s679] sm:$0xf]
  %v1426 = vld [vmem:[%s679 + $0x4] sm:$0xf]
  %v1427 = vld [vmem:[%s679 + $0x8] sm:$0xf]
  %v1428 = vld [vmem:[%s679 + $0xc] sm:$0xf]
  %v1429 = vld [vmem:[%s679 + $0x10] sm:$0xf]
  %v1430 = vld [vmem:[%s679 + $0x14] sm:$0xf]
  %v1431 = vld [vmem:[%s679 + $0x18] sm:$0xf]
  %v1432 = vld [vmem:[%s679 + $0x1c] sm:$0xf]
  %v1433 = vld [vmem:[%s679 + $0x20] sm:$0xf]
  %v1434 = vld [vmem:[%s679 + $0x24] sm:$0xf]
  %v1435 = vld [vmem:[%s679 + $0x28] sm:$0xf]
  %v1436 = vld [vmem:[%s679 + $0x2c] sm:$0xf]
  %v1437 = vld [vmem:[%s679 + $0x30] sm:$0xf]
  %v1438 = vld [vmem:[%s679 + $0x34] sm:$0xf]
  %v1439 = vld [vmem:[%s679 + $0x38] sm:$0xf]
  %v1440 = vld [vmem:[%s679 + $0x3c] sm:$0xf]
  %v1444 = vunpack.c.l.b16 %v1422
  %v1445 = vunpack.c.l.b16 %v1423
  %v1446 = vunpack.c.l.b16 %v1424
  %v1447 = vpack.c.b16 %v1445, %v1444
  %v1448 = vpack.c.b16 %v1446, %v1446
  %v1450 = vshrl.u32 %v1447, 16
  %v1452 = vshll.u32 %v1447, 16
  %v1454 = vrot.slane %v1452, 1
  %v1455 = vor.u32 %v1450, %v1454
  %v1457 = vshll.u32 %v1448, 16
  %v1459 = vrot.slane %v1457, 1
  %v1460 = vsel %vm315, %v1455, %v1459
  %v1478 = vunpack.c.l.b16 %v1425
  %v1479 = vunpack.c.l.b16 %v1426
  %v1480 = vunpack.c.l.b16 %v1427
  %v1481 = vunpack.c.l.b16 %v1428
  %v1482 = vunpack.c.l.b16 %v1429
  %v1483 = vunpack.c.l.b16 %v1430
  %v1484 = vunpack.c.l.b16 %v1431
  %v1485 = vunpack.c.l.b16 %v1432
  %v1486 = vunpack.c.l.b16 %v1433
  %v1487 = vunpack.c.l.b16 %v1434
  %v1488 = vunpack.c.l.b16 %v1435
  %v1489 = vunpack.c.l.b16 %v1436
  %v1490 = vunpack.c.l.b16 %v1437
  %v1491 = vunpack.c.l.b16 %v1438
  %v1492 = vunpack.c.l.b16 %v1439
  %v1493 = vunpack.c.l.b16 %v1440
  %v1494 = vpack.c.b16 %v1479, %v1478
  %v1495 = vpack.c.b16 %v1481, %v1480
  %v1496 = vpack.c.b16 %v1483, %v1482
  %v1497 = vpack.c.b16 %v1485, %v1484
  %v1498 = vpack.c.b16 %v1487, %v1486
  %v1499 = vpack.c.b16 %v1489, %v1488
  %v1500 = vpack.c.b16 %v1491, %v1490
  %v1501 = vpack.c.b16 %v1493, %v1492
  %1510 = vmatprep.subr.bf16.mxu0 0
  %1511 = vmatpush1.bf16.msra.mxu0 %v1494
  %1512 = vmatprep.subr.bf16.mxu0 0
  %1513 = vmatpush1.bf16.msra.mxu0 %v1495
  %1514 = vmatprep.subr.bf16.mxu0 0
  %1515 = vmatpush1.bf16.msra.mxu0 %v1496
  %1516 = vmatprep.subr.bf16.mxu0 0
  %1517 = vmatpush1.bf16.msra.mxu0 %v1497
  %1518 = vmatprep.subr.bf16.mxu0 0
  %1519 = vmatpush1.bf16.msra.mxu0 %v1498
  %1520 = vmatprep.subr.bf16.mxu0 0
  %1521 = vmatpush1.bf16.msra.mxu0 %v1499
  %1522 = vmatprep.subr.bf16.mxu0 0
  %1523 = vmatpush1.bf16.msra.mxu0 %v1500
  %1524 = vmatprep.subr.bf16.mxu0 0
  %1525 = vmatpush1.bf16.msra.mxu0 %v1501
  %1526 = vmatprep.subr.bf16.mxu0 0
  %1527 = vmatpush1.bf16.msra.mxu0 0
  %1528 = vmatprep.subr.bf16.mxu0 0
  %1529 = vmatpush1.bf16.msra.mxu0 0
  %1530 = vmatprep.subr.bf16.mxu0 0
  %1531 = vmatpush1.bf16.msra.mxu0 0
  %1532 = vmatprep.subr.bf16.mxu0 0
  %1533 = vmatpush1.bf16.msra.mxu0 0
  %1534 = vmatprep.subr.bf16.mxu0 0
  %1535 = vmatpush1.bf16.msra.mxu0 0
  %1536 = vmatprep.subr.bf16.mxu0 0
  %1537 = vmatpush1.bf16.msra.mxu0 0
  %1538 = vmatprep.subr.bf16.mxu0 0
  %1539 = vmatpush1.bf16.msra.mxu0 0
  %1540 = vmatprep.subr.bf16.mxu0 0
  %1541 = vmatpush1.bf16.msra.mxu0 0
  %1542 = vmatprep.mubr.bf16.mxu0 0
  %1543 = vmatmul.mubr.bf16.gmra.mrb[0].mxu0 %v1460
  %v1544 = vpop.f32.mrb[0].mxu0
  %v1545 = vadd.f32 0.0, %v1544
  %v1546 = vpop.f32.mrb[0].mxu0
  %v1547 = vpop.f32.mrb[0].mxu0
  %v1548 = vadd.f32 0.0, %v1547
  %v1549 = vpop.f32.mrb[0].mxu0
  %1550 = vdwg.mxu0
  %v1551 = vadd.f32 %v1420, %v1545
  %v1552 = vadd.f32 %v1421, %v1548
  %v1553 = vmax.f32 %v1551, 0.0
  %v1554 = vmax.f32 %v1552, 0.0
  %v1555 = vadd.f32 %v1553, %v1161
  %v1556 = vadd.f32 %v1554, %v1163
  %s1557 = scalar_lea.vmem %s5, 16
  %1558 = vst [vmem:[%s1557] sm:$0xff] %v1555
  %1559 = vst [vmem:[%s1557 + $0x8] sm:$0xff] %v1556
  // Predicated region
  $region22: #{res_conv_block_2d.1} parent=0 // pred_check
    _
  $region23: #{res_conv_block_2d.1} parent=0 // pred_check_branch
    %1561 = sbr.rel (0) target = $region25
  $region24: #{res_conv_block_2d.1} parent=0 // pred_region
    _
  $region25: #{res_conv_block_2d.1} parent=0 // pred_fallthru
    _
  // Predicated region
  $region26: #{res_conv_block_2d.1} parent=0 // pred_check
    _
  $region27: #{res_conv_block_2d.1} parent=0 // pred_check_branch
    %1563 = sbr.rel (0) target = $region29
  $region28: #{res_conv_block_2d.1} parent=0 // pred_region
    _
  $region29: #{res_conv_block_2d.1} parent=0 // pred_fallthru
    _

</llo_original>
